<compile_context>
chip_gen: v6e
topology: v6e:2x2x1
jax: 0.10.0
libtpu: 0.0.40
codegen_flags: <defaults>
</compile_context>

<pallas_src>
import jax
import jax.numpy as jnp
from jax.experimental import pallas as pl
from jax.experimental.pallas import tpu as pltpu

_MiB = 1024 * 1024


def _round_up(x, m):
    return ((x + m - 1) // m) * m


# ---------------------------------------------------------------------------
# Exact GELU via Abramowitz & Stegun 7.1.26 erf approximation (|err| <= 1.5e-7).
# Uses only ops guaranteed to lower in Mosaic (abs/mul/add/div/exp/where).
_ERF_P = 0.3275911
_ERF_A1 = 0.254829592
_ERF_A2 = -0.284496736
_ERF_A3 = 1.421413741
_ERF_A4 = -1.453152027
_ERF_A5 = 1.061405429
_INV_SQRT2 = 0.7071067811865476


def _erf(x):
    a = jnp.abs(x)
    t = 1.0 / (1.0 + _ERF_P * a)
    poly = t * (_ERF_A1 + t * (_ERF_A2 + t * (_ERF_A3 + t * (_ERF_A4 + t * _ERF_A5))))
    y = 1.0 - poly * jnp.exp(-(a * a))
    return jnp.where(x < 0.0, -y, y)


def _gelu_exact(x):
    return 0.5 * x * (1.0 + _erf(x * _INV_SQRT2))


# ---------------------------------------------------------------------------
def _mlp2x_gelu_kernel(x_ref, w1_ref, b1_ref, w2_ref, b2_ref, o_ref, h_ref):
    # Grid: (row tiles i, output-column tiles j of the second matmul).
    j = pl.program_id(1)

    @pl.when(j == 0)
    def _():
        # First matmul + bias + exact GELU, computed once per row tile (f32 accum),
        # cached in VMEM scratch in the matmul-2 dtype and reused across all j.
        h = jnp.dot(x_ref[...], w1_ref[...], preferred_element_type=jnp.float32)
        h = h + b1_ref[...].astype(jnp.float32)
        h_ref[...] = _gelu_exact(h).astype(h_ref.dtype)

    # Second matmul over the full reduction dim H, restricted to tn output columns.
    y = jnp.dot(h_ref[...], w2_ref[...], preferred_element_type=jnp.float32)
    y = y + b2_ref[...].astype(jnp.float32)
    o_ref[...] = y.astype(o_ref.dtype)


def _vmem_capacity_bytes():
    try:
        cap = int(getattr(pltpu.get_tpu_info(), "vmem_capacity_bytes", 0))
        if cap > 0:
            return cap
    except Exception:
        pass
    return 64 * _MiB  # conservative default: fits every TPU generation


def projector_forward(image_features, params, *, tm=512, tn=None):
    """Pallas equivalent of Projector.forward (mlp2x_gelu base projector).

    image_features: tuple/list; element 0 has shape [B, 1, N, C].
    params: dict with w1 (C, H), b1 (H,), w2 (H, H), b2 (H,).
    Returns [B, N, H] in the activation dtype.
    """
    x4 = image_features[0]
    assert x4.shape[1] == 1, "squeeze(1) expects a size-1 dim"
    x3 = jnp.squeeze(x4, axis=1)                  # [B, N, C]
    B, N, C = x3.shape
    M = B * N
    x = x3.reshape(M, C)

    w1, b1, w2, b2 = params["w1"], params["b1"], params["w2"], params["b2"]
    H = w1.shape[1]
    b1_2d = b1.reshape(1, H)
    b2_2d = b2.reshape(1, H)

    act_isz = jnp.dtype(x.dtype).itemsize
    w_isz = jnp.dtype(w1.dtype).itemsize
    b1_isz = jnp.dtype(b1.dtype).itemsize
    b2_isz = jnp.dtype(b2.dtype).itemsize
    scratch_dtype = w2.dtype                      # bf16 scratch for bf16 weights, f32 for f32
    scr_isz = jnp.dtype(scratch_dtype).itemsize

    vmem_cap = _vmem_capacity_bytes()
    budget = vmem_cap - 16 * _MiB                 # headroom for compiler internals

    # --- Row tiling: minimize padding. Sublane alignment: 8 rows f32, 16 rows bf16.
    row_align = max(8, 32 // max(act_isz, 1))
    grid_m = max(1, pl.cdiv(M, max(tm, row_align)))
    tm_eff = _round_up(pl.cdiv(M, grid_m), row_align)
    # v7x-class chips (<= ~80 MiB VMEM) have 2 TensorCores: give the "parallel"
    # row axis at least 2 tiles to shard when M allows it.
    if vmem_cap <= 80 * _MiB and grid_m == 1 and M >= 2 * row_align:
        grid_m = 2
        tm_eff = _round_up(pl.cdiv(M, grid_m), row_align)
    grid_m = pl.cdiv(M, tm_eff)
    M_pad = grid_m * tm_eff
    if M_pad != M:
        x = jnp.pad(x, ((0, M_pad - M), (0, 0)))

    single_buf_ok = hasattr(pl, "Buffered")

    def footprint(tn_cand, single_w):
        full = tn_cand == H
        w1_bufs = 1 if single_w else 2
        w2_bufs = 1 if (full and single_w) else 2
        return (2 * tm_eff * C * act_isz                       # x tile (double-buffered)
                + 2 * tm_eff * tn_cand * act_isz               # out tile
                + w1_bufs * (C * H * w_isz + H * b1_isz)       # W1 + b1
                + w2_bufs * (H * tn_cand * w_isz + tn_cand * b2_isz)  # W2 + b2
                + tm_eff * H * scr_isz)                        # GELU scratch

    # --- Column tiling of the second matmul: prefer a fully VMEM-resident W2
    # (fetched from HBM exactly once, typical on v5e/v6e); otherwise pick the
    # largest 128-multiple column tile fitting the VMEM budget (v7x).
    if tn is not None and (tn == H or (tn % 128 == 0 and H % tn == 0 and tn < H)):
        tn_eff = tn
    else:
        candidates = [H] + [t for t in (2048, 1024, 512, 256, 128)
                            if t < H and H % t == 0]
        tn_eff = candidates[-1]
        for cand in candidates:
            if footprint(cand, single_buf_ok) <= budget:
                tn_eff = cand
                break
    grid_n = H // tn_eff

    # Advisory cost estimate (W2 re-streamed once per row tile iff column-tiled).
    w2_reads = grid_m if grid_n > 1 else 1
    flops = 2 * M_pad * (C * H + H * H)
    bytes_accessed = int(
        M_pad * C * act_isz
        + C * H * w_isz + H * b1_isz
        + w2_reads * (H * H * w_isz + H * b2_isz)
        + M_pad * H * act_isz)
    cost = pl.CostEstimate(flops=int(flops), transcendentals=int(M_pad * H),
                           bytes_accessed=bytes_accessed)

    def build_and_run(single_buffer_weights):
        fp = footprint(tn_eff, single_buffer_weights)
        vmem_limit = int(min(vmem_cap - 4 * _MiB, max(32 * _MiB, fp + 16 * _MiB)))
        const_kw = ({"pipeline_mode": pl.Buffered(1)}
                    if single_buffer_weights else {})
        w2_kw = const_kw if grid_n == 1 else {}
        grid_spec = pltpu.PrefetchScalarGridSpec(
            num_scalar_prefetch=0,
            grid=(grid_m, grid_n),
            in_specs=[
                pl.BlockSpec((tm_eff, C), lambda i, j: (i, 0)),              # x row tile
                pl.BlockSpec((C, H), lambda i, j: (0, 0), **const_kw),       # W1 (resident)
                pl.BlockSpec((1, H), lambda i, j: (0, 0), **const_kw),       # b1
                pl.BlockSpec((H, tn_eff), lambda i, j: (0, j), **w2_kw),     # W2 (tile/resident)
                pl.BlockSpec((1, tn_eff), lambda i, j: (0, j), **w2_kw),     # b2
            ],
            out_specs=pl.BlockSpec((tm_eff, tn_eff), lambda i, j: (i, j)),
            scratch_shapes=[pltpu.VMEM((tm_eff, H), scratch_dtype)],         # GELU cache
        )
        call = pl.pallas_call(
            _mlp2x_gelu_kernel,
            out_shape=jax.ShapeDtypeStruct((M_pad, H), x.dtype),
            grid_spec=grid_spec,
            compiler_params=pltpu.CompilerParams(
                # Rows independent -> megacore-shardable; the column axis reuses the
                # GELU scratch computed at j == 0, so it must stay sequential.
                dimension_semantics=("parallel", "arbitrary"),
                vmem_limit_bytes=vmem_limit,
            ),
            cost_estimate=cost,
        )
        return jax.block_until_ready(call(x, w1, b1_2d, w2, b2_2d))

    if single_buf_ok:
        try:
            out = build_and_run(True)
        except Exception:
            # pipeline_mode=Buffered(1) unsupported on this jax/backend -> default buffering.
            out = build_and_run(False)
    else:
        out = build_and_run(False)

    return out[:M].reshape(B, N, H)


def init_params(key, mm_hidden, hidden, dtype=jnp.float32):
    k1, k2, k3, k4 = jax.random.split(key, 4)
    # deterministic synthetic init (kaiming-ish scale), not a checkpoint load
    w1 = jax.random.normal(k1, (mm_hidden, hidden), dtype) * (1.0 / jnp.sqrt(mm_hidden))
    b1 = jax.random.normal(k2, (hidden,), dtype) * 0.01
    w2 = jax.random.normal(k3, (hidden, hidden), dtype) * (1.0 / jnp.sqrt(hidden))
    b2 = jax.random.normal(k4, (hidden,), dtype) * 0.01
    return {"w1": w1, "b1": b1, "w2": w2, "b2": b2}


def _reference(image_features, params):
    x = jnp.squeeze(image_features[0], axis=1)
    h = jax.nn.gelu(x @ params["w1"] + params["b1"], approximate=False)
    return h @ params["w2"] + params["b2"]


if __name__ == "__main__":
    key = jax.random.PRNGKey(0)
    kx1, kp1, kx2, kp2 = jax.random.split(key, 4)

    # --- Test 1: f32, forced column tiling (tn=128 -> grid_n=2): exercises the
    # cached-GELU-scratch reuse path.
    B, N, C, H = 2, 8, 64, 256
    img0 = jax.random.normal(kx1, (B, 1, N, C), jnp.float32)
    params = init_params(kp1, mm_hidden=C, hidden=H, dtype=jnp.float32)

    out = projector_forward((img0,), params, tn=128)
    out = jax.block_until_ready(out)
    ref = _reference((img0,), params)
    assert out.shape == (B, N, H)
    # Tolerance covers MXU-vs-XLA default matmul precision differences for f32.
    assert jnp.allclose(out, ref, atol=1e-2, rtol=1e-2), "f32 mismatch vs reference"

    # --- Test 2: bf16 weights/activations, auto tiling (full-resident W2, grid_n=1),
    # non-tile-multiple row count (exercises the padding path).
    B2, N2 = 2, 7                                  # M = 14, padded to the row tile
    img0b = jax.random.normal(kx2, (B2, 1, N2, C), jnp.float32).astype(jnp.bfloat16)
    p32 = init_params(kp2, mm_hidden=C, hidden=H, dtype=jnp.float32)
    p_bf16 = {"w1": p32["w1"].astype(jnp.bfloat16),
              "w2": p32["w2"].astype(jnp.bfloat16),
              "b1": p32["b1"], "b2": p32["b2"]}

    out2 = projector_forward((img0b,), p_bf16)
    out2 = jax.block_until_ready(out2)
    # f32 reference evaluated on the same bf16-quantized inputs/weights.
    ref2 = _reference((img0b.astype(jnp.float32),),
                      {"w1": p_bf16["w1"].astype(jnp.float32), "b1": p_bf16["b1"],
                       "w2": p_bf16["w2"].astype(jnp.float32), "b2": p_bf16["b2"]})
    assert out2.shape == (B2, N2, H)
    assert jnp.allclose(out2.astype(jnp.float32), ref2, atol=5e-2, rtol=5e-2), \
        "bf16 mismatch vs reference"

    print("KERNEL_OK")
</pallas_src>

<mosaic_0001>
module attributes {stable_mosaic.version = 11 : i64} {
  func.func @_mlp2x_gelu_kernel(%arg0: i32, %arg1: i32, %arg2: memref<8x64xf32, #tpu.memory_space<vmem>>, %arg3: memref<64x256xf32, #tpu.memory_space<vmem>>, %arg4: memref<1x256xf32, #tpu.memory_space<vmem>>, %arg5: memref<256x128xf32, #tpu.memory_space<vmem>>, %arg6: memref<1x128xf32, #tpu.memory_space<vmem>>, %arg7: memref<8x128xf32, #tpu.memory_space<vmem>>, %arg8: memref<8x256xf32, #tpu.memory_space<vmem>>) attributes {dimension_semantics = [#tpu.dimension_semantics<parallel>, #tpu.dimension_semantics<arbitrary>], iteration_bounds = array<i64: 2, 2>, scalar_prefetch = 0 : i64, scratch_operands = 1 : i64, tpu.core_type = #tpu.core_type<tc>, window_params = [{transform_indices = @transform_0, window_bounds = array<i64: 8, 64>}, {pipeline_mode = #tpu.pipeline_mode<synchronous>, transform_indices = @transform_1, window_bounds = array<i64: 64, 256>}, {pipeline_mode = #tpu.pipeline_mode<synchronous>, transform_indices = @transform_2, window_bounds = array<i64: 1, 256>}, {transform_indices = @transform_3, window_bounds = array<i64: 256, 128>}, {transform_indices = @transform_4, window_bounds = array<i64: 1, 128>}, {transform_indices = @transform_5, window_bounds = array<i64: 8, 128>}]} {
    %c0_i32 = arith.constant 0 : i32
    %0 = arith.cmpi eq, %arg1, %c0_i32 : i32
    %1 = arith.extui %0 : i1 to i32
    %c0_i32_0 = arith.constant 0 : i32
    %2 = arith.cmpi ne, %1, %c0_i32_0 : i32
    scf.if %2 {
      %c0_8 = arith.constant 0 : index
      %c0_9 = arith.constant 0 : index
      %10 = vector.load %arg2[%c0_8, %c0_9] : memref<8x64xf32, #tpu.memory_space<vmem>>, vector<8x64xf32>
      %c0_10 = arith.constant 0 : index
      %c0_11 = arith.constant 0 : index
      %11 = vector.load %arg3[%c0_10, %c0_11] : memref<64x256xf32, #tpu.memory_space<vmem>>, vector<64x256xf32>
      %cst_12 = arith.constant dense<0.000000e+00> : vector<8x256xf32>
      %12 = tpu.matmul %10, %11, %cst_12 {dimension_numbers = #tpu.dot_dimension_numbers<[1], [0], [0], [1], [0, 0, 1, 1], [], []>} : vector<8x64xf32>, vector<64x256xf32>, vector<8x256xf32> -> vector<8x256xf32>
      %c0_13 = arith.constant 0 : index
      %c0_14 = arith.constant 0 : index
      %13 = vector.load %arg4[%c0_13, %c0_14] : memref<1x256xf32, #tpu.memory_space<vmem>>, vector<1x256xf32>
      %14 = vector.broadcast %13 : vector<1x256xf32> to vector<8x256xf32>
      %15 = arith.addf %12, %14 : vector<8x256xf32>
      %cst_15 = arith.constant 5.000000e-01 : f32
      %16 = vector.broadcast %cst_15 : f32 to vector<8x256xf32>
      %17 = arith.mulf %16, %15 : vector<8x256xf32>
      %cst_16 = arith.constant 0.707106769 : f32
      %18 = vector.broadcast %cst_16 : f32 to vector<8x256xf32>
      %19 = arith.mulf %15, %18 : vector<8x256xf32>
      %20 = math.absf %19 : vector<8x256xf32>
      %cst_17 = arith.constant 0.327591091 : f32
      %21 = vector.broadcast %cst_17 : f32 to vector<8x256xf32>
      %22 = arith.mulf %21, %20 : vector<8x256xf32>
      %cst_18 = arith.constant 1.000000e+00 : f32
      %23 = vector.broadcast %cst_18 : f32 to vector<8x256xf32>
      %24 = arith.addf %23, %22 : vector<8x256xf32>
      %cst_19 = arith.constant 1.000000e+00 : f32
      %25 = vector.broadcast %cst_19 : f32 to vector<8x256xf32>
      %26 = arith.divf %25, %24 : vector<8x256xf32>
      %cst_20 = arith.constant 1.06140542 : f32
      %27 = vector.broadcast %cst_20 : f32 to vector<8x256xf32>
      %28 = arith.mulf %26, %27 : vector<8x256xf32>
      %cst_21 = arith.constant -1.45315206 : f32
      %29 = vector.broadcast %cst_21 : f32 to vector<8x256xf32>
      %30 = arith.addf %29, %28 : vector<8x256xf32>
      %31 = arith.mulf %26, %30 : vector<8x256xf32>
      %cst_22 = arith.constant 1.42141378 : f32
      %32 = vector.broadcast %cst_22 : f32 to vector<8x256xf32>
      %33 = arith.addf %32, %31 : vector<8x256xf32>
      %34 = arith.mulf %26, %33 : vector<8x256xf32>
      %cst_23 = arith.constant -0.284496725 : f32
      %35 = vector.broadcast %cst_23 : f32 to vector<8x256xf32>
      %36 = arith.addf %35, %34 : vector<8x256xf32>
      %37 = arith.mulf %26, %36 : vector<8x256xf32>
      %cst_24 = arith.constant 0.254829586 : f32
      %38 = vector.broadcast %cst_24 : f32 to vector<8x256xf32>
      %39 = arith.addf %38, %37 : vector<8x256xf32>
      %40 = arith.mulf %26, %39 : vector<8x256xf32>
      %41 = arith.mulf %20, %20 : vector<8x256xf32>
      %cst_25 = arith.constant 0.000000e+00 : f32
      %42 = vector.broadcast %cst_25 : f32 to vector<8x256xf32>
      %43 = arith.subf %42, %41 : vector<8x256xf32>
      %44 = math.exp %43 : vector<8x256xf32>
      %45 = arith.mulf %40, %44 : vector<8x256xf32>
      %cst_26 = arith.constant 1.000000e+00 : f32
      %46 = vector.broadcast %cst_26 : f32 to vector<8x256xf32>
      %47 = arith.subf %46, %45 : vector<8x256xf32>
      %cst_27 = arith.constant 0.000000e+00 : f32
      %48 = vector.broadcast %cst_27 : f32 to vector<8x256xf32>
      %49 = arith.cmpf olt, %19, %48 : vector<8x256xf32>
      %cst_28 = arith.constant 0.000000e+00 : f32
      %50 = vector.broadcast %cst_28 : f32 to vector<8x256xf32>
      %51 = arith.subf %50, %47 : vector<8x256xf32>
      %52 = arith.select %49, %51, %47 : vector<8x256xi1>, vector<8x256xf32>
      %cst_29 = arith.constant 1.000000e+00 : f32
      %53 = vector.broadcast %cst_29 : f32 to vector<8x256xf32>
      %54 = arith.addf %53, %52 : vector<8x256xf32>
      %55 = arith.mulf %17, %54 : vector<8x256xf32>
      %c0_30 = arith.constant 0 : index
      %c0_31 = arith.constant 0 : index
      %56 = vector.load %arg8[%c0_30, %c0_31] : memref<8x256xf32, #tpu.memory_space<vmem>>, vector<8x256xf32>
      tpu.vector_store %arg8[%c0_30, %c0_31], %55 {strides = array<i32>} : memref<8x256xf32, #tpu.memory_space<vmem>>, vector<8x256xf32>,
    } else {
    }
    %c0 = arith.constant 0 : index
    %c0_1 = arith.constant 0 : index
    %3 = vector.load %arg8[%c0, %c0_1] : memref<8x256xf32, #tpu.memory_space<vmem>>, vector<8x256xf32>
    %c0_2 = arith.constant 0 : index
    %c0_3 = arith.constant 0 : index
    %4 = vector.load %arg5[%c0_2, %c0_3] : memref<256x128xf32, #tpu.memory_space<vmem>>, vector<256x128xf32>
    %cst = arith.constant dense<0.000000e+00> : vector<8x128xf32>
    %5 = tpu.matmul %3, %4, %cst {dimension_numbers = #tpu.dot_dimension_numbers<[1], [0], [0], [1], [0, 0, 1, 1], [], []>} : vector<8x256xf32>, vector<256x128xf32>, vector<8x128xf32> -> vector<8x128xf32>
    %c0_4 = arith.constant 0 : index
    %c0_5 = arith.constant 0 : index
    %6 = vector.load %arg6[%c0_4, %c0_5] : memref<1x128xf32, #tpu.memory_space<vmem>>, vector<1x128xf32>
    %7 = vector.broadcast %6 : vector<1x128xf32> to vector<8x128xf32>
    %8 = arith.addf %5, %7 : vector<8x128xf32>
    %c0_6 = arith.constant 0 : index
    %c0_7 = arith.constant 0 : index
    %9 = vector.load %arg7[%c0_6, %c0_7] : memref<8x128xf32, #tpu.memory_space<vmem>>, vector<8x128xf32>
    tpu.vector_store %arg7[%c0_6, %c0_7], %8 {strides = array<i32>} : memref<8x128xf32, #tpu.memory_space<vmem>>, vector<8x128xf32>,
    return
  }
  func.func @transform_0(%arg0: i32, %arg1: i32) -> (i32, i32) {
    %c0_i32 = arith.constant 0 : i32
    %c0_i32_0 = arith.constant 0 : i32
    return %arg0, %c0_i32 : i32, i32
  }
  func.func @transform_1(%arg0: i32, %arg1: i32) -> (i32, i32) {
    %c0_i32 = arith.constant 0 : i32
    %c0_i32_0 = arith.constant 0 : i32
    %c0_i32_1 = arith.constant 0 : i32
    return %c0_i32, %c0_i32_0 : i32, i32
  }
  func.func @transform_2(%arg0: i32, %arg1: i32) -> (i32, i32) {
    %c0_i32 = arith.constant 0 : i32
    %c0_i32_0 = arith.constant 0 : i32
    %c0_i32_1 = arith.constant 0 : i32
    return %c0_i32, %c0_i32_0 : i32, i32
  }
  func.func @transform_3(%arg0: i32, %arg1: i32) -> (i32, i32) {
    %c0_i32 = arith.constant 0 : i32
    %c0_i32_0 = arith.constant 0 : i32
    return %c0_i32, %arg1 : i32, i32
  }
  func.func @transform_4(%arg0: i32, %arg1: i32) -> (i32, i32) {
    %c0_i32 = arith.constant 0 : i32
    %c0_i32_0 = arith.constant 0 : i32
    return %c0_i32, %arg1 : i32, i32
  }
  func.func @transform_5(%arg0: i32, %arg1: i32) -> (i32, i32) {
    %c0_i32 = arith.constant 0 : i32
    return %arg0, %arg1 : i32, i32
  }
}

module attributes {stable_mosaic.version = 11 : i64} {
  func.func @_mlp2x_gelu_kernel(%arg0: i32, %arg1: i32, %arg2: memref<8x64xf32, #tpu.memory_space<vmem>>, %arg3: memref<64x256xf32, #tpu.memory_space<vmem>>, %arg4: memref<1x256xf32, #tpu.memory_space<vmem>>, %arg5: memref<256x128xf32, #tpu.memory_space<vmem>>, %arg6: memref<1x128xf32, #tpu.memory_space<vmem>>, %arg7: memref<8x128xf32, #tpu.memory_space<vmem>>, %arg8: memref<8x256xf32, #tpu.memory_space<vmem>>) attributes {dimension_semantics = [#tpu.dimension_semantics<parallel>, #tpu.dimension_semantics<arbitrary>], iteration_bounds = array<i64: 2, 2>, scalar_prefetch = 0 : i64, scratch_operands = 1 : i64, tpu.core_type = #tpu.core_type<tc>, window_params = [{transform_indices = @transform_0, window_bounds = array<i64: 8, 64>}, {pipeline_mode = #tpu.pipeline_mode<synchronous>, transform_indices = @transform_1, window_bounds = array<i64: 64, 256>}, {pipeline_mode = #tpu.pipeline_mode<synchronous>, transform_indices = @transform_2, window_bounds = array<i64: 1, 256>}, {transform_indices = @transform_3, window_bounds = array<i64: 256, 128>}, {transform_indices = @transform_4, window_bounds = array<i64: 1, 128>}, {transform_indices = @transform_5, window_bounds = array<i64: 8, 128>}]} {
    %c0_i32 = arith.constant 0 : i32
    %0 = arith.cmpi eq, %arg1, %c0_i32 : i32
    %1 = arith.extui %0 : i1 to i32
    %c0_i32_0 = arith.constant 0 : i32
    %2 = arith.cmpi ne, %1, %c0_i32_0 : i32
    scf.if %2 {
      %c0_8 = arith.constant 0 : index
      %c0_9 = arith.constant 0 : index
      %10 = vector.load %arg2[%c0_8, %c0_9] : memref<8x64xf32, #tpu.memory_space<vmem>>, vector<8x64xf32>
      %c0_10 = arith.constant 0 : index
      %c0_11 = arith.constant 0 : index
      %11 = vector.load %arg3[%c0_10, %c0_11] : memref<64x256xf32, #tpu.memory_space<vmem>>, vector<64x256xf32>
      %cst_12 = arith.constant dense<0.000000e+00> : vector<8x256xf32>
      %12 = tpu.matmul %10, %11, %cst_12 {dimension_numbers = #tpu.dot_dimension_numbers<[1], [0], [0], [1], [0, 0, 1, 1], [], []>} : vector<8x64xf32>, vector<64x256xf32>, vector<8x256xf32> -> vector<8x256xf32>
      %c0_13 = arith.constant 0 : index
      %c0_14 = arith.constant 0 : index
      %13 = vector.load %arg4[%c0_13, %c0_14] : memref<1x256xf32, #tpu.memory_space<vmem>>, vector<1x256xf32>
      %14 = vector.broadcast %13 : vector<1x256xf32> to vector<8x256xf32>
      %15 = arith.addf %12, %14 : vector<8x256xf32>
      %cst_15 = arith.constant 5.000000e-01 : f32
      %16 = vector.broadcast %cst_15 : f32 to vector<8x256xf32>
      %17 = arith.mulf %16, %15 : vector<8x256xf32>
      %cst_16 = arith.constant 0.707106769 : f32
      %18 = vector.broadcast %cst_16 : f32 to vector<8x256xf32>
      %19 = arith.mulf %15, %18 : vector<8x256xf32>
      %20 = math.absf %19 : vector<8x256xf32>
      %cst_17 = arith.constant 0.327591091 : f32
      %21 = vector.broadcast %cst_17 : f32 to vector<8x256xf32>
      %22 = arith.mulf %21, %20 : vector<8x256xf32>
      %cst_18 = arith.constant 1.000000e+00 : f32
      %23 = vector.broadcast %cst_18 : f32 to vector<8x256xf32>
      %24 = arith.addf %23, %22 : vector<8x256xf32>
      %cst_19 = arith.constant 1.000000e+00 : f32
      %25 = vector.broadcast %cst_19 : f32 to vector<8x256xf32>
      %26 = arith.divf %25, %24 : vector<8x256xf32>
      %cst_20 = arith.constant 1.06140542 : f32
      %27 = vector.broadcast %cst_20 : f32 to vector<8x256xf32>
      %28 = arith.mulf %26, %27 : vector<8x256xf32>
      %cst_21 = arith.constant -1.45315206 : f32
      %29 = vector.broadcast %cst_21 : f32 to vector<8x256xf32>
      %30 = arith.addf %29, %28 : vector<8x256xf32>
      %31 = arith.mulf %26, %30 : vector<8x256xf32>
      %cst_22 = arith.constant 1.42141378 : f32
      %32 = vector.broadcast %cst_22 : f32 to vector<8x256xf32>
      %33 = arith.addf %32, %31 : vector<8x256xf32>
      %34 = arith.mulf %26, %33 : vector<8x256xf32>
      %cst_23 = arith.constant -0.284496725 : f32
      %35 = vector.broadcast %cst_23 : f32 to vector<8x256xf32>
      %36 = arith.addf %35, %34 : vector<8x256xf32>
      %37 = arith.mulf %26, %36 : vector<8x256xf32>
      %cst_24 = arith.constant 0.254829586 : f32
      %38 = vector.broadcast %cst_24 : f32 to vector<8x256xf32>
      %39 = arith.addf %38, %37 : vector<8x256xf32>
      %40 = arith.mulf %26, %39 : vector<8x256xf32>
      %41 = arith.mulf %20, %20 : vector<8x256xf32>
      %cst_25 = arith.constant 0.000000e+00 : f32
      %42 = vector.broadcast %cst_25 : f32 to vector<8x256xf32>
      %43 = arith.subf %42, %41 : vector<8x256xf32>
      %44 = math.exp %43 : vector<8x256xf32>
      %45 = arith.mulf %40, %44 : vector<8x256xf32>
      %cst_26 = arith.constant 1.000000e+00 : f32
      %46 = vector.broadcast %cst_26 : f32 to vector<8x256xf32>
      %47 = arith.subf %46, %45 : vector<8x256xf32>
      %cst_27 = arith.constant 0.000000e+00 : f32
      %48 = vector.broadcast %cst_27 : f32 to vector<8x256xf32>
      %49 = arith.cmpf olt, %19, %48 : vector<8x256xf32>
      %cst_28 = arith.constant 0.000000e+00 : f32
      %50 = vector.broadcast %cst_28 : f32 to vector<8x256xf32>
      %51 = arith.subf %50, %47 : vector<8x256xf32>
      %52 = arith.select %49, %51, %47 : vector<8x256xi1>, vector<8x256xf32>
      %cst_29 = arith.constant 1.000000e+00 : f32
      %53 = vector.broadcast %cst_29 : f32 to vector<8x256xf32>
      %54 = arith.addf %53, %52 : vector<8x256xf32>
      %55 = arith.mulf %17, %54 : vector<8x256xf32>
      %c0_30 = arith.constant 0 : index
      %c0_31 = arith.constant 0 : index
      %56 = vector.load %arg8[%c0_30, %c0_31] : memref<8x256xf32, #tpu.memory_space<vmem>>, vector<8x256xf32>
      tpu.vector_store %arg8[%c0_30, %c0_31], %55 {strides = array<i32>} : memref<8x256xf32, #tpu.memory_space<vmem>>, vector<8x256xf32>,
    } else {
    }
    %c0 = arith.constant 0 : index
    %c0_1 = arith.constant 0 : index
    %3 = vector.load %arg8[%c0, %c0_1] : memref<8x256xf32, #tpu.memory_space<vmem>>, vector<8x256xf32>
    %c0_2 = arith.constant 0 : index
    %c0_3 = arith.constant 0 : index
    %4 = vector.load %arg5[%c0_2, %c0_3] : memref<256x128xf32, #tpu.memory_space<vmem>>, vector<256x128xf32>
    %cst = arith.constant dense<0.000000e+00> : vector<8x128xf32>
    %5 = tpu.matmul %3, %4, %cst {dimension_numbers = #tpu.dot_dimension_numbers<[1], [0], [0], [1], [0, 0, 1, 1], [], []>} : vector<8x256xf32>, vector<256x128xf32>, vector<8x128xf32> -> vector<8x128xf32>
    %c0_4 = arith.constant 0 : index
    %c0_5 = arith.constant 0 : index
    %6 = vector.load %arg6[%c0_4, %c0_5] : memref<1x128xf32, #tpu.memory_space<vmem>>, vector<1x128xf32>
    %7 = vector.broadcast %6 : vector<1x128xf32> to vector<8x128xf32>
    %8 = arith.addf %5, %7 : vector<8x128xf32>
    %c0_6 = arith.constant 0 : index
    %c0_7 = arith.constant 0 : index
    %9 = vector.load %arg7[%c0_6, %c0_7] : memref<8x128xf32, #tpu.memory_space<vmem>>, vector<8x128xf32>
    tpu.vector_store %arg7[%c0_6, %c0_7], %8 {strides = array<i32>} : memref<8x128xf32, #tpu.memory_space<vmem>>, vector<8x128xf32>,
    return
  }
  func.func @transform_0(%arg0: i32, %arg1: i32) -> (i32, i32) {
    %c0_i32 = arith.constant 0 : i32
    %c0_i32_0 = arith.constant 0 : i32
    return %arg0, %c0_i32 : i32, i32
  }
  func.func @transform_1(%arg0: i32, %arg1: i32) -> (i32, i32) {
    %c0_i32 = arith.constant 0 : i32
    %c0_i32_0 = arith.constant 0 : i32
    %c0_i32_1 = arith.constant 0 : i32
    return %c0_i32, %c0_i32_0 : i32, i32
  }
  func.func @transform_2(%arg0: i32, %arg1: i32) -> (i32, i32) {
    %c0_i32 = arith.constant 0 : i32
    %c0_i32_0 = arith.constant 0 : i32
    %c0_i32_1 = arith.constant 0 : i32
    return %c0_i32, %c0_i32_0 : i32, i32
  }
  func.func @transform_3(%arg0: i32, %arg1: i32) -> (i32, i32) {
    %c0_i32 = arith.constant 0 : i32
    %c0_i32_0 = arith.constant 0 : i32
    return %c0_i32, %arg1 : i32, i32
  }
  func.func @transform_4(%arg0: i32, %arg1: i32) -> (i32, i32) {
    %c0_i32 = arith.constant 0 : i32
    %c0_i32_0 = arith.constant 0 : i32
    return %c0_i32, %arg1 : i32, i32
  }
  func.func @transform_5(%arg0: i32, %arg1: i32) -> (i32, i32) {
    %c0_i32 = arith.constant 0 : i32
    return %arg0, %arg1 : i32, i32
  }
}

</mosaic_0001>

<llo_original>
// kernel: tpu_custom_call.1
$region0: #{tpu_custom_call.1}
  #allocation0 [shape = 'u32[]', space=smem, size = 0x4, offset = 0x4, fixed_abs, tag = 'smem constant byte address 0x4 - core index']
  #allocation1 [shape = 'u32[144,128]{1,0:T(1,128)}', space=vmem, size = 0x12000, scoped, tag = 'internal scratch']
  #allocation2 [shape = 'f32[8,256]{1,0:T(8,128)}', space=vmem, size = 0x2000, scoped, tag = 'scratch operand']
  %s0 = inlined_call_operand.hbm [shape: f32[16,64], index: 0, kind: input, shape index: {}]
  %s1 = inlined_call_operand.hbm [shape: f32[64,256], index: 1, kind: input, shape index: {}]
  %s2 = inlined_call_operand.vmem [shape: f32[1,256], index: 2, kind: input, shape index: {}]
  %s3 = inlined_call_operand.hbm [shape: f32[256,256], index: 3, kind: input, shape index: {}]
  %s4 = inlined_call_operand.vmem [shape: f32[1,256], index: 4, kind: input, shape index: {}]
  %s5 = inlined_call_operand.hbm [shape: f32[16,256], index: 5, kind: output, shape index: {}]
  %s6 = sld [smem:[#allocation0]]
  $region69: #{tpu_custom_call.1} parent=0
    _
  %s8 = ssub.s32 1, %s6
  %s9 = scalar_select 0, %s8, %s6
  $region1: #{tpu_custom_call.1} parent=0
    #allocation3 [shape = 'u8[8192]{0}', space=vmem, size = 0x2000, scoped, tag = 'input window, operand 0']
    #allocation4 [shape = 's32[2]{0}', space=sflag, size = 0x8, scoped, tag = 'scoped memory for tpu_custom_call.1']
    #allocation5 [shape = 's32[2]{0}', space=sflag, size = 0x8, scoped, tag = 'scoped memory for tpu_custom_call.1']
    #allocation6 [shape = 'u8[65536]{0}', space=vmem, size = 0x10000, scoped, tag = 'input window, operand 1, single buffered']
    #allocation7 [shape = 's32[1]{0}', space=sflag, size = 0x4, scoped, tag = 'scoped memory for tpu_custom_call.1']
    #allocation8 [shape = 'u8[262144]{0}', space=vmem, size = 0x40000, scoped, tag = 'input window, operand 3']
    #allocation9 [shape = 'u8[8192]{0}', space=vmem, size = 0x2000, scoped, tag = 'output window, operand 0']
    %10 = vsyncpa [#allocation4], 0
    %s11 = scalar_lea.sflag [#allocation4], 1
    %12 = vsyncpa %s11, 0
    %13 = vsyncpa [#allocation7], 0
    %14 = vsyncpa [#allocation5], 0
    %s15 = scalar_lea.sflag [#allocation5], 1
    %16 = vsyncpa %s15, 0
    loop: start=0, step=1, limit=6
    $region2: #{tpu_custom_call.1} parent=1 // loop_pre_header
      _
    $region3: #{tpu_custom_call.1} parent=1 // loop_header
      %s18 = sphi 0, %s22
      %p19 = scmp.ge.s32.totalorder %s18, 6
      %s25 = sphi 0, %s37
      %s26 = sphi 0, %s33
      %s27 = sphi 0, %s25
      %s28 = sphi 0, %s26
      %s29 = sphi 0, %s27
      %s30 = sphi 0, %s28
      %s40 = sphi 0, %s42
      %s43 = sphi 0, %s40
      %s44 = sphi 0, %s43
      %s60 = sphi 0, %s44
      %s64 = sphi 0, %s64
      %s66 = sphi 0, %s64
      %s67 = sphi 0, %s66
      %s81 = sphi 0, %s67
      %s85 = sphi 0, %s85
      %s87 = sphi 0, %s85
      %s88 = sphi 0, %s87
      %s102 = sphi 0, %s88
      %s108 = sphi 0, %s110
      %s111 = sphi 0, %s108
      %s112 = sphi 0, %s111
      %s128 = sphi 0, %s112
      %s134 = sphi 0, %s136
      %s137 = sphi 0, %s134
      %s138 = sphi 0, %s137
      %s154 = sphi 0, %s138
      %s162 = sphi 0, %s164
      %s165 = sphi 0, %s162
      %s166 = sphi 0, %s165
      %s182 = sphi 0, %s166
    $region4: #{tpu_custom_call.1} parent=1 // loop_header_branch
      %21 = sbr.rel (%p19) target = $region8
    $region5: #{tpu_custom_call.1} parent=1 // loop_body
      %s23 = ssub.s32 %s18, 1
      %s24 = ssub.s32 %s18, 2
      %s31 = sadd.s32 1, %s26
      %p32 = scmp.ge.s32.totalorder %s31, 2
      %s33 = scalar_select %p32, 0, %s31
      %s34 = sadd.s32 1, %s25
      %s35 = scalar_select %p32, %s34, %s25
      %p36 = scmp.ge.s32.totalorder %s35, 2
      %s37 = scalar_select %p36, 0, %s35
      %s38 = ssub.s32 %s25, %s37
      %p39 = scmp.eq.s32.totalorder %s38, 0
      %s41 = sadd.s32 %s40, 1
      %s42 = scalar_select %p39, %s40, %s41
      %p45 = pneg %p39
      %p46 = scmp.eq.s32.totalorder %s18, 3
      %p47 = por %p45, %p46
      %p48 = scmp.ne.s32.totalorder %s40, %s43
      %p49 = scmp.eq.s32.totalorder %s18, 0
      %p50 = por %p48, %p49
      %p51 = scmp.ne.s32.totalorder %s40, %s43
      %p52 = scmp.eq.s32.totalorder %s23, 3
      %p53 = por %p51, %p52
      %p54 = scmp.ne.s32.totalorder %s43, %s44
      %p55 = scmp.eq.s32.totalorder %s23, 0
      %p56 = por %p54, %p55
      %p57 = scmp.ne.s32.totalorder %s43, %s44
      %p58 = scmp.eq.s32.totalorder %s24, 3
      %p59 = por %p57, %p58
      %p61 = scmp.ne.s32.totalorder %s44, %s60
      %p62 = scmp.eq.s32.totalorder %s24, 0
      %p63 = por %p61, %p62
      %s65 = sadd.s32 %s64, 1
      %p68 = scmp.eq.s32.totalorder %s18, 3
      %p69 = scmp.ne.s32.totalorder %s64, %s66
      %p70 = scmp.eq.s32.totalorder %s18, 0
      %p71 = por %p69, %p70
      %p72 = scmp.ne.s32.totalorder %s64, %s66
      %p73 = scmp.eq.s32.totalorder %s23, 3
      %p74 = por %p72, %p73
      %p75 = scmp.ne.s32.totalorder %s66, %s67
      %p76 = scmp.eq.s32.totalorder %s23, 0
      %p77 = por %p75, %p76
      %p78 = scmp.ne.s32.totalorder %s66, %s67
      %p79 = scmp.eq.s32.totalorder %s24, 3
      %p80 = por %p78, %p79
      %p82 = scmp.ne.s32.totalorder %s67, %s81
      %p83 = scmp.eq.s32.totalorder %s24, 0
      %p84 = por %p82, %p83
      %s86 = sadd.s32 %s85, 1
      %p89 = scmp.eq.s32.totalorder %s18, 3
      %p90 = scmp.ne.s32.totalorder %s85, %s87
      %p91 = scmp.eq.s32.totalorder %s18, 0
      %p92 = por %p90, %p91
      %p93 = scmp.ne.s32.totalorder %s85, %s87
      %p94 = scmp.eq.s32.totalorder %s23, 3
      %p95 = por %p93, %p94
      %p96 = scmp.ne.s32.totalorder %s87, %s88
      %p97 = scmp.eq.s32.totalorder %s23, 0
      %p98 = por %p96, %p97
      %p99 = scmp.ne.s32.totalorder %s87, %s88
      %p100 = scmp.eq.s32.totalorder %s24, 3
      %p101 = por %p99, %p100
      %p103 = scmp.ne.s32.totalorder %s88, %s102
      %p104 = scmp.eq.s32.totalorder %s24, 0
      %p105 = por %p103, %p104
      %s106 = ssub.s32 %s26, %s33
      %p107 = scmp.eq.s32.totalorder %s106, 0
      %s109 = sadd.s32 %s108, 1
      %s110 = scalar_select %p107, %s108, %s109
      %p113 = pneg %p107
      %p114 = scmp.eq.s32.totalorder %s18, 3
      %p115 = por %p113, %p114
      %p116 = scmp.ne.s32.totalorder %s108, %s111
      %p117 = scmp.eq.s32.totalorder %s18, 0
      %p118 = por %p116, %p117
      %p119 = scmp.ne.s32.totalorder %s108, %s111
      %p120 = scmp.eq.s32.totalorder %s23, 3
      %p121 = por %p119, %p120
      %p122 = scmp.ne.s32.totalorder %s111, %s112
      %p123 = scmp.eq.s32.totalorder %s23, 0
      %p124 = por %p122, %p123
      %p125 = scmp.ne.s32.totalorder %s111, %s112
      %p126 = scmp.eq.s32.totalorder %s24, 3
      %p127 = por %p125, %p126
      %p129 = scmp.ne.s32.totalorder %s112, %s128
      %p130 = scmp.eq.s32.totalorder %s24, 0
      %p131 = por %p129, %p130
      %s132 = ssub.s32 %s26, %s33
      %p133 = scmp.eq.s32.totalorder %s132, 0
      %s135 = sadd.s32 %s134, 1
      %s136 = scalar_select %p133, %s134, %s135
      %p139 = pneg %p133
      %p140 = scmp.eq.s32.totalorder %s18, 3
      %p141 = por %p139, %p140
      %p142 = scmp.ne.s32.totalorder %s134, %s137
      %p143 = scmp.eq.s32.totalorder %s18, 0
      %p144 = por %p142, %p143
      %p145 = scmp.ne.s32.totalorder %s134, %s137
      %p146 = scmp.eq.s32.totalorder %s23, 3
      %p147 = por %p145, %p146
      %p148 = scmp.ne.s32.totalorder %s137, %s138
      %p149 = scmp.eq.s32.totalorder %s23, 0
      %p150 = por %p148, %p149
      %p151 = scmp.ne.s32.totalorder %s137, %s138
      %p152 = scmp.eq.s32.totalorder %s24, 3
      %p153 = por %p151, %p152
      %p155 = scmp.ne.s32.totalorder %s138, %s154
      %p156 = scmp.eq.s32.totalorder %s24, 0
      %p157 = por %p155, %p156
      %s158 = ssub.s32 %s25, %s37
      %s159 = ssub.s32 %s26, %s33
      %s160 = sor.u32 %s158, %s159
      %p161 = scmp.eq.s32.totalorder %s160, 0
      %s163 = sadd.s32 %s162, 1
      %s164 = scalar_select %p161, %s162, %s163
      %p167 = pneg %p161
      %p168 = scmp.eq.s32.totalorder %s18, 3
      %p169 = por %p167, %p168
      %p170 = scmp.ne.s32.totalorder %s162, %s165
      %p171 = scmp.eq.s32.totalorder %s18, 0
      %p172 = por %p170, %p171
      %p173 = scmp.ne.s32.totalorder %s162, %s165
      %p174 = scmp.eq.s32.totalorder %s23, 3
      %p175 = por %p173, %p174
      %p176 = scmp.ne.s32.totalorder %s165, %s166
      %p177 = scmp.eq.s32.totalorder %s23, 0
      %p178 = por %p176, %p177
      %p179 = scmp.ne.s32.totalorder %s165, %s166
      %p180 = scmp.eq.s32.totalorder %s24, 3
      %p181 = por %p179, %p180
      %p183 = scmp.ne.s32.totalorder %s166, %s182
      %p184 = scmp.eq.s32.totalorder %s24, 0
      %p185 = por %p183, %p184
      %p186 = scmp.le.s32.totalorder 1, %s18
      %p187 = scmp.lt.s32.totalorder %s18, 5
      %p188 = pnand %p186, %p187
      %p189 = pneg %p188
      // Predicated region
      $region9: #{tpu_custom_call.1} parent=5 // pred_check
        _
      $region10: #{tpu_custom_call.1} parent=5 // pred_check_branch
        %191 = sbr.rel (%p188) target = $region12
      $region11: #{tpu_custom_call.1} parent=5 // pred_region
        %s192 = ssub.s32 %s18, 1
        // Predicated region
        $region13: #{tpu_custom_call.1} parent=11 // pred_check
          %p193 = pneg %p77
        $region14: #{tpu_custom_call.1} parent=11 // pred_check_branch
          %195 = sbr.rel (%p193) target = $region16
        $region15: #{tpu_custom_call.1} parent=11 // pred_region
          %s197 = ssub.s32 2048, 2048
          %198 = vsyncadd [#allocation7], %s197
          %s199 = sshll.u32 [#allocation6], 4
          %s200 = int_to_ptr.vmem [resolvable:$true] %s199
          %205 = dma.hbm_to_vmem [thread:$0]  %s1, 2048, %s200, [#allocation7], 256, 256, 16
        $region16: #{tpu_custom_call.1} parent=11 // pred_fallthru
          _
        // Predicated region
        $region17: #{tpu_custom_call.1} parent=11 // pred_check
          %p206 = pneg %p98
        $region18: #{tpu_custom_call.1} parent=11 // pred_check_branch
          %208 = sbr.rel (%p206) target = $region20
        $region19: #{tpu_custom_call.1} parent=11 // pred_region
          _
        $region20: #{tpu_custom_call.1} parent=11 // pred_fallthru
          _
      $region12: #{tpu_custom_call.1} parent=5 // pred_fallthru
        _
      %p209 = scmp.lt.s32.totalorder %s18, 4
      // Predicated region
      $region21: #{tpu_custom_call.1} parent=5 // pred_check
        %p210 = pneg %p209
      $region22: #{tpu_custom_call.1} parent=5 // pred_check_branch
        %212 = sbr.rel (%p210) target = $region24
      $region23: #{tpu_custom_call.1} parent=5 // pred_region
        // Predicated region
        $region25: #{tpu_custom_call.1} parent=23 // pred_check
          %p213 = pneg %p50
        $region26: #{tpu_custom_call.1} parent=23 // pred_check_branch
          %215 = sbr.rel (%p213) target = $region28
        $region27: #{tpu_custom_call.1} parent=23 // pred_region
          %s216 = sand.u32 %s18, 1
          %s217 = scalar_lea.sflag [#allocation4], %s216
          %s218 = sand.u32 %s40, 1
          %s219 = smul.addr %s218, 8
          %s220 = scalar_lea.vmem [#allocation3], %s219
          %s222 = ssub.s32 128, 128
          %223 = vsyncadd %s217, %s222
          %s224 = smul.addr %s25, 128
          %s225 = scalar_lea.hbm %s0, %s224
          %s227 = sshll.u32 %s220, 4
          %s228 = int_to_ptr.vmem [resolvable:$true] %s227
          %230 = dma.hbm_to_vmem [thread:$0]  %s225, 128, %s228, %s217
        $region28: #{tpu_custom_call.1} parent=23 // pred_fallthru
          _
        // Predicated region
        $region29: #{tpu_custom_call.1} parent=23 // pred_check
          %p231 = pneg %p118
        $region30: #{tpu_custom_call.1} parent=23 // pred_check_branch
          %233 = sbr.rel (%p231) target = $region32
        $region31: #{tpu_custom_call.1} parent=23 // pred_region
          %s234 = sand.u32 %s18, 1
          %s235 = scalar_lea.sflag [#allocation4], %s234
          %s236 = sand.u32 %s108, 1
          %s237 = smul.addr %s236, 256
          %s238 = scalar_lea.vmem [#allocation8], %s237
          %s240 = ssub.s32 4096, 4096
          %241 = vsyncadd %s235, %s240
          %s242 = smul.addr %s26, 128
          %s243 = scalar_lea.hbm %s3, %s242
          %s244 = sshll.u32 %s238, 4
          %s245 = int_to_ptr.vmem [resolvable:$true] %s244
          %250 = dma.hbm_to_vmem [thread:$0]  %s243, 4096, %s245, %s235, 256, 128, 8
        $region32: #{tpu_custom_call.1} parent=23 // pred_fallthru
          _
        // Predicated region
        $region33: #{tpu_custom_call.1} parent=23 // pred_check
          %p251 = pneg %p144
        $region34: #{tpu_custom_call.1} parent=23 // pred_check_branch
          %253 = sbr.rel (%p251) target = $region36
        $region35: #{tpu_custom_call.1} parent=23 // pred_region
          %p254 = scmp.lt.s32.totalorder %s26, 1
          %s255 = scalar_select %p254, %s26, 1
          %s256 = scalar_lea.vmem %s4, %s255
        $region36: #{tpu_custom_call.1} parent=23 // pred_fallthru
          _
      $region24: #{tpu_custom_call.1} parent=5 // pred_fallthru
        _
      %p257 = scmp.le.s32.totalorder 1, %s18
      %p258 = scmp.lt.s32.totalorder %s18, 5
      %p259 = pnand %p257, %p258
      %p260 = pneg %p259
      // Predicated region
      $region37: #{tpu_custom_call.1} parent=5 // pred_check
        _
      $region38: #{tpu_custom_call.1} parent=5 // pred_check_branch
        %262 = sbr.rel (%p259) target = $region40
      $region39: #{tpu_custom_call.1} parent=5 // pred_region
        %s263 = ssub.s32 %s18, 1
        %s264 = sand.u32 %s23, 1
        %s265 = scalar_lea.sflag [#allocation4], %s264
        %s266 = sand.u32 %s43, 1
        %s267 = smul.addr %s266, 8
        %s268 = scalar_lea.vmem [#allocation3], %s267
        // Predicated region
        $region41: #{tpu_custom_call.1} parent=39 // pred_check
          %p269 = pneg %p56
        $region42: #{tpu_custom_call.1} parent=39 // pred_check_branch
          %271 = sbr.rel (%p269) target = $region44
        $region43: #{tpu_custom_call.1} parent=39 // pred_region
          %272 = dma.done %s265, 128
        $region44: #{tpu_custom_call.1} parent=39 // pred_fallthru
          _
        // Predicated region
        $region45: #{tpu_custom_call.1} parent=39 // pred_check
          %p273 = pneg %p77
        $region46: #{tpu_custom_call.1} parent=39 // pred_check_branch
          %275 = sbr.rel (%p273) target = $region48
        $region47: #{tpu_custom_call.1} parent=39 // pred_region
          %276 = dma.done [#allocation7], 2048
        $region48: #{tpu_custom_call.1} parent=39 // pred_fallthru
          _
        %s277 = sand.u32 %s23, 1
        %s278 = scalar_lea.sflag [#allocation4], %s277
        %s279 = sand.u32 %s111, 1
        %s280 = smul.addr %s279, 256
        %s281 = scalar_lea.vmem [#allocation8], %s280
        // Predicated region
        $region49: #{tpu_custom_call.1} parent=39 // pred_check
          %p282 = pneg %p124
        $region50: #{tpu_custom_call.1} parent=39 // pred_check_branch
          %284 = sbr.rel (%p282) target = $region52
        $region51: #{tpu_custom_call.1} parent=39 // pred_region
          %285 = dma.done %s278, 4096
        $region52: #{tpu_custom_call.1} parent=39 // pred_fallthru
          _
        %s286 = sand.u32 %s23, 1
        %s287 = scalar_lea.sflag [#allocation4], %s286
        %s288 = sand.u32 %s43, 1
        %s289 = smul.addr %s288, 8
        %s290 = scalar_lea.vmem [#allocation3], %s289
        %p291 = pneg %p56
        %p292 = pneg %p53
        %p293 = pneg %p77
        %p294 = pneg %p74
        %p295 = pneg %p98
        %p296 = pneg %p95
        %s297 = sand.u32 %s23, 1
        %s298 = scalar_lea.sflag [#allocation4], %s297
        %s299 = sand.u32 %s111, 1
        %s300 = smul.addr %s299, 256
        %s301 = scalar_lea.vmem [#allocation8], %s300
        %p302 = pneg %p124
        %p303 = pneg %p121
        %p304 = scmp.lt.s32.totalorder %s28, 1
        %s305 = scalar_select %p304, %s28, 1
        %s306 = scalar_lea.vmem %s4, %s305
        %p307 = pneg %p150
        %p308 = pneg %p147
        %p309 = pneg %p178
        %p310 = pneg %p175
        %s311 = sand.u32 %s165, 1
        %s312 = scalar_lea.sflag [#allocation5], %s311
        %s313 = sand.u32 %s165, 1
        %s314 = smul.addr %s313, 8
        %s315 = scalar_lea.vmem [#allocation9], %s314
        %p316 = scmp.lt.s32.totalorder %s28, 1
        %s317 = scalar_select %p316, %s28, 1
        %s318 = scalar_lea.vmem %s4, %s317
        %p319 = scmp.eq.s32.totalorder %s28, 0
        // Predicated region
        $region53: #{tpu_custom_call.1} parent=39 // pred_check
          %p320 = pneg %p319
        $region54: #{tpu_custom_call.1} parent=39 // pred_check_branch
          %322 = sbr.rel (%p320) target = $region56
        $region55: #{tpu_custom_call.1} parent=39 // pred_region
          %v323 = vld [vmem:[%s268] sm:$0xff]
          %v324 = vld [vmem:[#allocation6] sm:$0xff]
          %v325 = vld [vmem:[#allocation6 + $0x8] sm:$0xff]
          %v326 = vld [vmem:[#allocation6 + $0x10] sm:$0xff]
          %v327 = vld [vmem:[#allocation6 + $0x18] sm:$0xff]
          %v328 = vld [vmem:[#allocation6 + $0x20] sm:$0xff]
          %v329 = vld [vmem:[#allocation6 + $0x28] sm:$0xff]
          %v330 = vld [vmem:[#allocation6 + $0x30] sm:$0xff]
          %v331 = vld [vmem:[#allocation6 + $0x38] sm:$0xff]
          %v332 = vld [vmem:[#allocation6 + $0x40] sm:$0xff]
          %v333 = vld [vmem:[#allocation6 + $0x48] sm:$0xff]
          %v334 = vld [vmem:[#allocation6 + $0x50] sm:$0xff]
          %v335 = vld [vmem:[#allocation6 + $0x58] sm:$0xff]
          %v336 = vld [vmem:[#allocation6 + $0x60] sm:$0xff]
          %v337 = vld [vmem:[#allocation6 + $0x68] sm:$0xff]
          %v338 = vld [vmem:[#allocation6 + $0x70] sm:$0xff]
          %v339 = vld [vmem:[#allocation6 + $0x78] sm:$0xff]
          %v340 = vld [vmem:[%s2] sm:$0x3]
          %v342 = vlaneseq
          %v343 = vshrl.u32 %v342, 7
          %v344 = vsub.s32 0, %v343
          %v345 = vrot.slane %v340, %v344
          %v346 = vlaneseq
          %v347 = vshrl.u32 %v346, 7
          %v348 = vsub.s32 1, %v347
          %v349 = vrot.slane %v340, %v348
          %vm352 = vcmask 523264
          %v354 = vsel %vm352, %v323, 0
          %356 = vmatprep.subr.mxu0 0.0
          %357 = vmatpush1.msra.mxu0 0.0
          %358 = vmatprep.subr.mxu0 0.0
          %359 = vmatpush1.msra.mxu0 0.0
          %360 = vmatprep.subr.mxu0 0.0
          %361 = vmatpush1.msra.mxu0 0.0
          %362 = vmatprep.subr.mxu0 0.0
          %363 = vmatpush1.msra.mxu0 0.0
          %364 = vmatprep.subr.mxu0 0.0
          %365 = vmatpush1.msra.mxu0 0.0
          %366 = vmatprep.subr.mxu0 0.0
          %367 = vmatpush1.msra.mxu0 0.0
          %368 = vmatprep.subr.mxu0 0.0
          %369 = vmatpush1.msra.mxu0 0.0
          %370 = vmatprep.subr.mxu0 0.0
          %371 = vmatpush1.msra.mxu0 0.0
          %372 = vmatprep.subr.mxu0 %v339
          %373 = vmatpush1.msra.mxu0 %v338
          %374 = vmatprep.subr.mxu0 %v337
          %375 = vmatpush1.msra.mxu0 %v336
          %376 = vmatprep.subr.mxu0 %v335
          %377 = vmatpush1.msra.mxu0 %v334
          %378 = vmatprep.subr.mxu0 %v333
          %379 = vmatpush1.msra.mxu0 %v332
          %380 = vmatprep.subr.mxu0 %v331
          %381 = vmatpush1.msra.mxu0 %v330
          %382 = vmatprep.subr.mxu0 %v329
          %383 = vmatpush1.msra.mxu0 %v328
          %384 = vmatprep.subr.mxu0 %v327
          %385 = vmatpush1.msra.mxu0 %v326
          %386 = vmatprep.subr.mxu0 %v325
          %387 = vmatpush1.msra.mxu0 %v324
          %388 = vmatprep.subr.mxu0 0.0
          %389 = vmatpush2.msra.mxu0 0.0
          %390 = vmatprep.subr.mxu0 0.0
          %391 = vmatpush2.msra.mxu0 0.0
          %392 = vmatprep.subr.mxu0 0.0
          %393 = vmatpush2.msra.mxu0 0.0
          %394 = vmatprep.subr.mxu0 0.0
          %395 = vmatpush2.msra.mxu0 0.0
          %396 = vmatprep.subr.mxu0 0.0
          %397 = vmatpush2.msra.mxu0 0.0
          %398 = vmatprep.subr.mxu0 0.0
          %399 = vmatpush2.msra.mxu0 0.0
          %400 = vmatprep.subr.mxu0 0.0
          %401 = vmatpush2.msra.mxu0 0.0
          %402 = vmatprep.subr.mxu0 0.0
          %403 = vmatpush2.msra.mxu0 0.0
          %404 = vmatprep.subr.mxu0 0.0
          %405 = vmatpush2.msra.mxu0 0.0
          %406 = vmatprep.subr.mxu0 0.0
          %407 = vmatpush2.msra.mxu0 0.0
          %408 = vmatprep.subr.mxu0 0.0
          %409 = vmatpush2.msra.mxu0 0.0
          %410 = vmatprep.subr.mxu0 0.0
          %411 = vmatpush2.msra.mxu0 0.0
          %412 = vmatprep.subr.mxu0 0.0
          %413 = vmatpush2.msra.mxu0 0.0
          %414 = vmatprep.subr.mxu0 0.0
          %415 = vmatpush2.msra.mxu0 0.0
          %416 = vmatprep.subr.mxu0 0.0
          %417 = vmatpush2.msra.mxu0 0.0
          %418 = vmatprep.subr.mxu0 0.0
          %419 = vmatpush2.msra.mxu0 0.0
          %420 = vmatprep.mubr.f32.mxu0 0.0
          %421 = vmatmul.mubr.f32.gmra.mxu0 %v354
          %v422 = vpop.f32.mrf.mxu0
          %v423 = vadd.f32 %v345, %v422
          %v424 = vpop.f32.mrf.mxu0
          %v425 = vadd.f32 %v349, %v424
          %426 = vdwg.mxu0
          %v427 = vmul.f32 %v423, 0.5
          %v428 = vmul.f32 %v425, 0.5
          %v429 = vmul.f32 %v423, 0.70710677
          %v430 = vmul.f32 %v425, 0.70710677
          %v431 = vand.u32 2147483647, %v429
          %v432 = vand.u32 2147483647, %v430
          %v433 = vmul.f32 %v431, 0.3275911
          %v434 = vmul.f32 %v432, 0.3275911
          %v435 = vadd.f32 %v433, 1.0
          %v436 = vadd.f32 %v434, 1.0
          %v437 = vrcp.pop %v435
          %v438 = vmul.f32 1.0, %v437
          %v439 = vrcp.pop %v436
          %v440 = vmul.f32 1.0, %v439
          %v441 = vmul.f32 %v438, 1.0614054
          %v442 = vmul.f32 %v440, 1.0614054
          %v443 = vadd.f32 %v441, -1.4531521
          %v444 = vadd.f32 %v442, -1.4531521
          %v445 = vmul.f32 %v438, %v443
          %v446 = vmul.f32 %v440, %v444
          %v447 = vadd.f32 %v445, 1.4214138
          %v448 = vadd.f32 %v446, 1.4214138
          %v449 = vmul.f32 %v438, %v447
          %v450 = vmul.f32 %v440, %v448
          %v451 = vadd.f32 %v449, -0.28449672
          %v452 = vadd.f32 %v450, -0.28449672
          %v453 = vmul.f32 %v438, %v451
          %v454 = vmul.f32 %v440, %v452
          %v455 = vadd.f32 %v453, 0.2548296
          %v456 = vadd.f32 %v454, 0.2548296
          %v457 = vmul.f32 %v438, %v455
          %v458 = vmul.f32 %v440, %v456
          %v459 = vmul.f32 %v431, %v431
          %v460 = vmul.f32 %v432, %v432
          %v461 = vsub.f32 0.0, %v459
          %v462 = vsub.f32 0.0, %v460
          %v463 = vmul.f32 %v461, 1.442695
          %v464 = vpow.pop %v463
          %v465 = vmul.f32 %v462, 1.442695
          %v466 = vpow.pop %v465
          %v467 = vmul.f32 %v457, %v464
          %v468 = vmul.f32 %v458, %v466
          %v469 = vsub.f32 1.0, %v467
          %v470 = vsub.f32 1.0, %v468
          %vm471 = vcmp.lt.f32.partialorder %v429, 0.0
          %vm472 = vcmp.lt.f32.partialorder %v430, 0.0
          %v473 = vsub.f32 0.0, %v469
          %v474 = vsub.f32 0.0, %v470
          %v475 = vsel %vm471, %v473, %v469
          %v476 = vsel %vm472, %v474, %v470
          %v477 = vadd.f32 %v475, 1.0
          %v478 = vadd.f32 %v476, 1.0
          %v479 = vmul.f32 %v427, %v477
          %v480 = vmul.f32 %v428, %v478
          %481 = vst [vmem:[#allocation2] sm:$0xff] %v479
          %482 = vst [vmem:[#allocation2 + $0x8] sm:$0xff] %v480
        $region56: #{tpu_custom_call.1} parent=39 // pred_fallthru
          _
        %v483 = vld [vmem:[#allocation2] sm:$0xff]
        %v484 = vld [vmem:[#allocation2 + $0x8] sm:$0xff]
        %v485 = vld [vmem:[%s281] sm:$0xff]
        %v486 = vld [vmem:[%s281 + $0x8] sm:$0xff]
        %v487 = vld [vmem:[%s281 + $0x10] sm:$0xff]
        %v488 = vld [vmem:[%s281 + $0x18] sm:$0xff]
        %v489 = vld [vmem:[%s281 + $0x20] sm:$0xff]
        %v490 = vld [vmem:[%s281 + $0x28] sm:$0xff]
        %v491 = vld [vmem:[%s281 + $0x30] sm:$0xff]
        %v492 = vld [vmem:[%s281 + $0x38] sm:$0xff]
        %v493 = vld [vmem:[%s281 + $0x40] sm:$0xff]
        %v494 = vld [vmem:[%s281 + $0x48] sm:$0xff]
        %v495 = vld [vmem:[%s281 + $0x50] sm:$0xff]
        %v496 = vld [vmem:[%s281 + $0x58] sm:$0xff]
        %v497 = vld [vmem:[%s281 + $0x60] sm:$0xff]
        %v498 = vld [vmem:[%s281 + $0x68] sm:$0xff]
        %v499 = vld [vmem:[%s281 + $0x70] sm:$0xff]
        %v500 = vld [vmem:[%s281 + $0x78] sm:$0xff]
        %v501 = vld [vmem:[%s281 + $0x80] sm:$0xff]
        %v502 = vld [vmem:[%s281 + $0x88] sm:$0xff]
        %v503 = vld [vmem:[%s281 + $0x90] sm:$0xff]
        %v504 = vld [vmem:[%s281 + $0x98] sm:$0xff]
        %v505 = vld [vmem:[%s281 + $0xa0] sm:$0xff]
        %v506 = vld [vmem:[%s281 + $0xa8] sm:$0xff]
        %v507 = vld [vmem:[%s281 + $0xb0] sm:$0xff]
        %v508 = vld [vmem:[%s281 + $0xb8] sm:$0xff]
        %v509 = vld [vmem:[%s281 + $0xc0] sm:$0xff]
        %v510 = vld [vmem:[%s281 + $0xc8] sm:$0xff]
        %v511 = vld [vmem:[%s281 + $0xd0] sm:$0xff]
        %v512 = vld [vmem:[%s281 + $0xd8] sm:$0xff]
        %v513 = vld [vmem:[%s281 + $0xe0] sm:$0xff]
        %v514 = vld [vmem:[%s281 + $0xe8] sm:$0xff]
        %v515 = vld [vmem:[%s281 + $0xf0] sm:$0xff]
        %v516 = vld [vmem:[%s281 + $0xf8] sm:$0xff]
        %v517 = vld [vmem:[%s318] sm:$0x1]
        %v519 = vlaneseq
        %v520 = vshrl.u32 %v519, 7
        %v521 = vsub.s32 0, %v520
        %v522 = vrot.slane %v517, %v521
        %524 = vmatprep.subr.mxu0 0.0
        %525 = vmatpush1.msra.mxu0 %v500
        %526 = vmatprep.subr.mxu0 0.0
        %527 = vmatpush1.msra.mxu0 %v499
        %528 = vmatprep.subr.mxu0 0.0
        %529 = vmatpush1.msra.mxu0 %v498
        %530 = vmatprep.subr.mxu0 0.0
        %531 = vmatpush1.msra.mxu0 %v497
        %532 = vmatprep.subr.mxu0 0.0
        %533 = vmatpush1.msra.mxu0 %v496
        %534 = vmatprep.subr.mxu0 0.0
        %535 = vmatpush1.msra.mxu0 %v495
        %536 = vmatprep.subr.mxu0 0.0
        %537 = vmatpush1.msra.mxu0 %v494
        %538 = vmatprep.subr.mxu0 0.0
        %539 = vmatpush1.msra.mxu0 %v493
        %540 = vmatprep.subr.mxu0 0.0
        %541 = vmatpush1.msra.mxu0 %v492
        %542 = vmatprep.subr.mxu0 0.0
        %543 = vmatpush1.msra.mxu0 %v491
        %544 = vmatprep.subr.mxu0 0.0
        %545 = vmatpush1.msra.mxu0 %v490
        %546 = vmatprep.subr.mxu0 0.0
        %547 = vmatpush1.msra.mxu0 %v489
        %548 = vmatprep.subr.mxu0 0.0
        %549 = vmatpush1.msra.mxu0 %v488
        %550 = vmatprep.subr.mxu0 0.0
        %551 = vmatpush1.msra.mxu0 %v487
        %552 = vmatprep.subr.mxu0 0.0
        %553 = vmatpush1.msra.mxu0 %v486
        %554 = vmatprep.subr.mxu0 0.0
        %555 = vmatpush1.msra.mxu0 %v485
        %556 = vmatprep.subr.mxu0 0.0
        %557 = vmatpush2.msra.mxu0 %v516
        %558 = vmatprep.subr.mxu0 0.0
        %559 = vmatpush2.msra.mxu0 %v515
        %560 = vmatprep.subr.mxu0 0.0
        %561 = vmatpush2.msra.mxu0 %v514
        %562 = vmatprep.subr.mxu0 0.0
        %563 = vmatpush2.msra.mxu0 %v513
        %564 = vmatprep.subr.mxu0 0.0
        %565 = vmatpush2.msra.mxu0 %v512
        %566 = vmatprep.subr.mxu0 0.0
        %567 = vmatpush2.msra.mxu0 %v511
        %568 = vmatprep.subr.mxu0 0.0
        %569 = vmatpush2.msra.mxu0 %v510
        %570 = vmatprep.subr.mxu0 0.0
        %571 = vmatpush2.msra.mxu0 %v509
        %572 = vmatprep.subr.mxu0 0.0
        %573 = vmatpush2.msra.mxu0 %v508
        %574 = vmatprep.subr.mxu0 0.0
        %575 = vmatpush2.msra.mxu0 %v507
        %576 = vmatprep.subr.mxu0 0.0
        %577 = vmatpush2.msra.mxu0 %v506
        %578 = vmatprep.subr.mxu0 0.0
        %579 = vmatpush2.msra.mxu0 %v505
        %580 = vmatprep.subr.mxu0 0.0
        %581 = vmatpush2.msra.mxu0 %v504
        %582 = vmatprep.subr.mxu0 0.0
        %583 = vmatpush2.msra.mxu0 %v503
        %584 = vmatprep.subr.mxu0 0.0
        %585 = vmatpush2.msra.mxu0 %v502
        %586 = vmatprep.subr.mxu0 0.0
        %587 = vmatpush2.msra.mxu0 %v501
        %588 = vmatprep.mubr.f32.mxu0 %v484
        %589 = vmatmul.mubr.f32.gmra.mxu0 %v483
        %v590 = vpop.f32.mrf.mxu0
        %v591 = vadd.f32 %v522, %v590
        %v592 = vpop.f32.mrf.mxu0
        %593 = vdwg.mxu0
        %594 = vst [vmem:[%s315] sm:$0xff] %v591
        %s595 = sand.u32 %s165, 1
        %s596 = scalar_lea.sflag [#allocation5], %s595
        %s597 = sand.u32 %s165, 1
        %s598 = smul.addr %s597, 8
        %s599 = scalar_lea.vmem [#allocation9], %s598
        // Predicated region
        $region57: #{tpu_custom_call.1} parent=39 // pred_check
          %p600 = pneg %p175
        $region58: #{tpu_custom_call.1} parent=39 // pred_check_branch
          %602 = sbr.rel (%p600) target = $region60
        $region59: #{tpu_custom_call.1} parent=39 // pred_region
          %s604 = ssub.s32 128, 128
          %605 = vsyncadd %s596, %s604
          %s606 = smul.addr %s27, 2
          %s607 = sadd.s32 %s28, %s606
          %s608 = smul.addr %s607, 128
          %s609 = scalar_lea.hbm %s5, %s608
          %s611 = sshll.u32 %s599, 4
          %s612 = int_to_ptr.vmem [resolvable:$true] %s611
          %614 = dma.vmem_to_hbm [thread:$0]  %s612, 128, %s609, %s596
        $region60: #{tpu_custom_call.1} parent=39 // pred_fallthru
          _
      $region40: #{tpu_custom_call.1} parent=5 // pred_fallthru
        _
      %p615 = scmp.le.s32.totalorder 2, %s18
      // Predicated region
      $region61: #{tpu_custom_call.1} parent=5 // pred_check
        %p616 = pneg %p615
      $region62: #{tpu_custom_call.1} parent=5 // pred_check_branch
        %618 = sbr.rel (%p616) target = $region64
      $region63: #{tpu_custom_call.1} parent=5 // pred_region
        %s619 = ssub.s32 %s18, 2
        // Predicated region
        $region65: #{tpu_custom_call.1} parent=63 // pred_check
          %p620 = pneg %p181
        $region66: #{tpu_custom_call.1} parent=63 // pred_check_branch
          %622 = sbr.rel (%p620) target = $region68
        $region67: #{tpu_custom_call.1} parent=63 // pred_region
          %s623 = sand.u32 %s166, 1
          %s624 = scalar_lea.sflag [#allocation5], %s623
          %s625 = sand.u32 %s166, 1
          %s626 = smul.addr %s625, 8
          %s627 = scalar_lea.vmem [#allocation9], %s626
          %628 = dma.done %s624, 128
        $region68: #{tpu_custom_call.1} parent=63 // pred_fallthru
          _
      $region64: #{tpu_custom_call.1} parent=5 // pred_fallthru
        _
    $region6: #{tpu_custom_call.1} parent=1 // loop_footer
      %s22 = sadd.s32 1, %s18
    $region7: #{tpu_custom_call.1} parent=1 // loop_footer_branch
      %17 = sbr.rel target = $region3
    $region8: #{tpu_custom_call.1} parent=1 // loop_exit
      _
    %629 = vsyncpa [#allocation4], 1
    %s630 = scalar_lea.sflag [#allocation4], 1
    %631 = vsyncpa %s630, 1
    %632 = vsyncpa [#allocation7], 1
    %633 = vsyncpa [#allocation5], 1
    %s634 = scalar_lea.sflag [#allocation5], 1
    %635 = vsyncpa %s634, 1

// kernel: tpu_custom_call.1
$region0: #{tpu_custom_call.1}
  #allocation0 [shape = 'u32[]', space=smem, size = 0x4, offset = 0x4, fixed_abs, tag = 'smem constant byte address 0x4 - core index']
  #allocation1 [shape = 'u32[144,128]{1,0:T(1,128)}', space=vmem, size = 0x12000, scoped, tag = 'internal scratch']
  #allocation2 [shape = 'f32[8,256]{1,0:T(8,128)}', space=vmem, size = 0x2000, scoped, tag = 'scratch operand']
  %s0 = inlined_call_operand.hbm [shape: f32[16,64], index: 0, kind: input, shape index: {}]
  %s1 = inlined_call_operand.hbm [shape: f32[64,256], index: 1, kind: input, shape index: {}]
  %s2 = inlined_call_operand.vmem [shape: f32[1,256], index: 2, kind: input, shape index: {}]
  %s3 = inlined_call_operand.hbm [shape: f32[256,256], index: 3, kind: input, shape index: {}]
  %s4 = inlined_call_operand.vmem [shape: f32[1,256], index: 4, kind: input, shape index: {}]
  %s5 = inlined_call_operand.hbm [shape: f32[16,256], index: 5, kind: output, shape index: {}]
  %s6 = sld [smem:[#allocation0]]
  $region69: #{tpu_custom_call.1} parent=0
    _
  %s8 = ssub.s32 1, %s6
  %s9 = scalar_select 0, %s8, %s6
  $region1: #{tpu_custom_call.1} parent=0
    #allocation3 [shape = 'u8[8192]{0}', space=vmem, size = 0x2000, scoped, tag = 'input window, operand 0']
    #allocation4 [shape = 's32[2]{0}', space=sflag, size = 0x8, scoped, tag = 'scoped memory for tpu_custom_call.1']
    #allocation5 [shape = 's32[2]{0}', space=sflag, size = 0x8, scoped, tag = 'scoped memory for tpu_custom_call.1']
    #allocation6 [shape = 'u8[65536]{0}', space=vmem, size = 0x10000, scoped, tag = 'input window, operand 1, single buffered']
    #allocation7 [shape = 's32[1]{0}', space=sflag, size = 0x4, scoped, tag = 'scoped memory for tpu_custom_call.1']
    #allocation8 [shape = 'u8[262144]{0}', space=vmem, size = 0x40000, scoped, tag = 'input window, operand 3']
    #allocation9 [shape = 'u8[8192]{0}', space=vmem, size = 0x2000, scoped, tag = 'output window, operand 0']
    %10 = vsyncpa [#allocation4], 0
    %s11 = scalar_lea.sflag [#allocation4], 1
    %12 = vsyncpa %s11, 0
    %13 = vsyncpa [#allocation7], 0
    %14 = vsyncpa [#allocation5], 0
    %s15 = scalar_lea.sflag [#allocation5], 1
    %16 = vsyncpa %s15, 0
    loop: start=0, step=1, limit=6
    $region2: #{tpu_custom_call.1} parent=1 // loop_pre_header
      _
    $region3: #{tpu_custom_call.1} parent=1 // loop_header
      %s18 = sphi 0, %s22
      %p19 = scmp.ge.s32.totalorder %s18, 6
      %s25 = sphi 0, %s37
      %s26 = sphi 0, %s33
      %s27 = sphi 0, %s25
      %s28 = sphi 0, %s26
      %s29 = sphi 0, %s27
      %s30 = sphi 0, %s28
      %s40 = sphi 0, %s42
      %s43 = sphi 0, %s40
      %s44 = sphi 0, %s43
      %s60 = sphi 0, %s44
      %s64 = sphi 0, %s64
      %s66 = sphi 0, %s64
      %s67 = sphi 0, %s66
      %s81 = sphi 0, %s67
      %s85 = sphi 0, %s85
      %s87 = sphi 0, %s85
      %s88 = sphi 0, %s87
      %s102 = sphi 0, %s88
      %s108 = sphi 0, %s110
      %s111 = sphi 0, %s108
      %s112 = sphi 0, %s111
      %s128 = sphi 0, %s112
      %s134 = sphi 0, %s136
      %s137 = sphi 0, %s134
      %s138 = sphi 0, %s137
      %s154 = sphi 0, %s138
      %s162 = sphi 0, %s164
      %s165 = sphi 0, %s162
      %s166 = sphi 0, %s165
      %s182 = sphi 0, %s166
    $region4: #{tpu_custom_call.1} parent=1 // loop_header_branch
      %21 = sbr.rel (%p19) target = $region8
    $region5: #{tpu_custom_call.1} parent=1 // loop_body
      %s23 = ssub.s32 %s18, 1
      %s24 = ssub.s32 %s18, 2
      %s31 = sadd.s32 1, %s26
      %p32 = scmp.ge.s32.totalorder %s31, 2
      %s33 = scalar_select %p32, 0, %s31
      %s34 = sadd.s32 1, %s25
      %s35 = scalar_select %p32, %s34, %s25
      %p36 = scmp.ge.s32.totalorder %s35, 2
      %s37 = scalar_select %p36, 0, %s35
      %s38 = ssub.s32 %s25, %s37
      %p39 = scmp.eq.s32.totalorder %s38, 0
      %s41 = sadd.s32 %s40, 1
      %s42 = scalar_select %p39, %s40, %s41
      %p45 = pneg %p39
      %p46 = scmp.eq.s32.totalorder %s18, 3
      %p47 = por %p45, %p46
      %p48 = scmp.ne.s32.totalorder %s40, %s43
      %p49 = scmp.eq.s32.totalorder %s18, 0
      %p50 = por %p48, %p49
      %p51 = scmp.ne.s32.totalorder %s40, %s43
      %p52 = scmp.eq.s32.totalorder %s23, 3
      %p53 = por %p51, %p52
      %p54 = scmp.ne.s32.totalorder %s43, %s44
      %p55 = scmp.eq.s32.totalorder %s23, 0
      %p56 = por %p54, %p55
      %p57 = scmp.ne.s32.totalorder %s43, %s44
      %p58 = scmp.eq.s32.totalorder %s24, 3
      %p59 = por %p57, %p58
      %p61 = scmp.ne.s32.totalorder %s44, %s60
      %p62 = scmp.eq.s32.totalorder %s24, 0
      %p63 = por %p61, %p62
      %s65 = sadd.s32 %s64, 1
      %p68 = scmp.eq.s32.totalorder %s18, 3
      %p69 = scmp.ne.s32.totalorder %s64, %s66
      %p70 = scmp.eq.s32.totalorder %s18, 0
      %p71 = por %p69, %p70
      %p72 = scmp.ne.s32.totalorder %s64, %s66
      %p73 = scmp.eq.s32.totalorder %s23, 3
      %p74 = por %p72, %p73
      %p75 = scmp.ne.s32.totalorder %s66, %s67
      %p76 = scmp.eq.s32.totalorder %s23, 0
      %p77 = por %p75, %p76
      %p78 = scmp.ne.s32.totalorder %s66, %s67
      %p79 = scmp.eq.s32.totalorder %s24, 3
      %p80 = por %p78, %p79
      %p82 = scmp.ne.s32.totalorder %s67, %s81
      %p83 = scmp.eq.s32.totalorder %s24, 0
      %p84 = por %p82, %p83
      %s86 = sadd.s32 %s85, 1
      %p89 = scmp.eq.s32.totalorder %s18, 3
      %p90 = scmp.ne.s32.totalorder %s85, %s87
      %p91 = scmp.eq.s32.totalorder %s18, 0
      %p92 = por %p90, %p91
      %p93 = scmp.ne.s32.totalorder %s85, %s87
      %p94 = scmp.eq.s32.totalorder %s23, 3
      %p95 = por %p93, %p94
      %p96 = scmp.ne.s32.totalorder %s87, %s88
      %p97 = scmp.eq.s32.totalorder %s23, 0
      %p98 = por %p96, %p97
      %p99 = scmp.ne.s32.totalorder %s87, %s88
      %p100 = scmp.eq.s32.totalorder %s24, 3
      %p101 = por %p99, %p100
      %p103 = scmp.ne.s32.totalorder %s88, %s102
      %p104 = scmp.eq.s32.totalorder %s24, 0
      %p105 = por %p103, %p104
      %s106 = ssub.s32 %s26, %s33
      %p107 = scmp.eq.s32.totalorder %s106, 0
      %s109 = sadd.s32 %s108, 1
      %s110 = scalar_select %p107, %s108, %s109
      %p113 = pneg %p107
      %p114 = scmp.eq.s32.totalorder %s18, 3
      %p115 = por %p113, %p114
      %p116 = scmp.ne.s32.totalorder %s108, %s111
      %p117 = scmp.eq.s32.totalorder %s18, 0
      %p118 = por %p116, %p117
      %p119 = scmp.ne.s32.totalorder %s108, %s111
      %p120 = scmp.eq.s32.totalorder %s23, 3
      %p121 = por %p119, %p120
      %p122 = scmp.ne.s32.totalorder %s111, %s112
      %p123 = scmp.eq.s32.totalorder %s23, 0
      %p124 = por %p122, %p123
      %p125 = scmp.ne.s32.totalorder %s111, %s112
      %p126 = scmp.eq.s32.totalorder %s24, 3
      %p127 = por %p125, %p126
      %p129 = scmp.ne.s32.totalorder %s112, %s128
      %p130 = scmp.eq.s32.totalorder %s24, 0
      %p131 = por %p129, %p130
      %s132 = ssub.s32 %s26, %s33
      %p133 = scmp.eq.s32.totalorder %s132, 0
      %s135 = sadd.s32 %s134, 1
      %s136 = scalar_select %p133, %s134, %s135
      %p139 = pneg %p133
      %p140 = scmp.eq.s32.totalorder %s18, 3
      %p141 = por %p139, %p140
      %p142 = scmp.ne.s32.totalorder %s134, %s137
      %p143 = scmp.eq.s32.totalorder %s18, 0
      %p144 = por %p142, %p143
      %p145 = scmp.ne.s32.totalorder %s134, %s137
      %p146 = scmp.eq.s32.totalorder %s23, 3
      %p147 = por %p145, %p146
      %p148 = scmp.ne.s32.totalorder %s137, %s138
      %p149 = scmp.eq.s32.totalorder %s23, 0
      %p150 = por %p148, %p149
      %p151 = scmp.ne.s32.totalorder %s137, %s138
      %p152 = scmp.eq.s32.totalorder %s24, 3
      %p153 = por %p151, %p152
      %p155 = scmp.ne.s32.totalorder %s138, %s154
      %p156 = scmp.eq.s32.totalorder %s24, 0
      %p157 = por %p155, %p156
      %s158 = ssub.s32 %s25, %s37
      %s159 = ssub.s32 %s26, %s33
      %s160 = sor.u32 %s158, %s159
      %p161 = scmp.eq.s32.totalorder %s160, 0
      %s163 = sadd.s32 %s162, 1
      %s164 = scalar_select %p161, %s162, %s163
      %p167 = pneg %p161
      %p168 = scmp.eq.s32.totalorder %s18, 3
      %p169 = por %p167, %p168
      %p170 = scmp.ne.s32.totalorder %s162, %s165
      %p171 = scmp.eq.s32.totalorder %s18, 0
      %p172 = por %p170, %p171
      %p173 = scmp.ne.s32.totalorder %s162, %s165
      %p174 = scmp.eq.s32.totalorder %s23, 3
      %p175 = por %p173, %p174
      %p176 = scmp.ne.s32.totalorder %s165, %s166
      %p177 = scmp.eq.s32.totalorder %s23, 0
      %p178 = por %p176, %p177
      %p179 = scmp.ne.s32.totalorder %s165, %s166
      %p180 = scmp.eq.s32.totalorder %s24, 3
      %p181 = por %p179, %p180
      %p183 = scmp.ne.s32.totalorder %s166, %s182
      %p184 = scmp.eq.s32.totalorder %s24, 0
      %p185 = por %p183, %p184
      %p186 = scmp.le.s32.totalorder 1, %s18
      %p187 = scmp.lt.s32.totalorder %s18, 5
      %p188 = pnand %p186, %p187
      %p189 = pneg %p188
      // Predicated region
      $region9: #{tpu_custom_call.1} parent=5 // pred_check
        _
      $region10: #{tpu_custom_call.1} parent=5 // pred_check_branch
        %191 = sbr.rel (%p188) target = $region12
      $region11: #{tpu_custom_call.1} parent=5 // pred_region
        %s192 = ssub.s32 %s18, 1
        // Predicated region
        $region13: #{tpu_custom_call.1} parent=11 // pred_check
          %p193 = pneg %p77
        $region14: #{tpu_custom_call.1} parent=11 // pred_check_branch
          %195 = sbr.rel (%p193) target = $region16
        $region15: #{tpu_custom_call.1} parent=11 // pred_region
          %s197 = ssub.s32 2048, 2048
          %198 = vsyncadd [#allocation7], %s197
          %s199 = sshll.u32 [#allocation6], 4
          %s200 = int_to_ptr.vmem [resolvable:$true] %s199
          %205 = dma.hbm_to_vmem [thread:$0]  %s1, 2048, %s200, [#allocation7], 256, 256, 16
        $region16: #{tpu_custom_call.1} parent=11 // pred_fallthru
          _
        // Predicated region
        $region17: #{tpu_custom_call.1} parent=11 // pred_check
          %p206 = pneg %p98
        $region18: #{tpu_custom_call.1} parent=11 // pred_check_branch
          %208 = sbr.rel (%p206) target = $region20
        $region19: #{tpu_custom_call.1} parent=11 // pred_region
          _
        $region20: #{tpu_custom_call.1} parent=11 // pred_fallthru
          _
      $region12: #{tpu_custom_call.1} parent=5 // pred_fallthru
        _
      %p209 = scmp.lt.s32.totalorder %s18, 4
      // Predicated region
      $region21: #{tpu_custom_call.1} parent=5 // pred_check
        %p210 = pneg %p209
      $region22: #{tpu_custom_call.1} parent=5 // pred_check_branch
        %212 = sbr.rel (%p210) target = $region24
      $region23: #{tpu_custom_call.1} parent=5 // pred_region
        // Predicated region
        $region25: #{tpu_custom_call.1} parent=23 // pred_check
          %p213 = pneg %p50
        $region26: #{tpu_custom_call.1} parent=23 // pred_check_branch
          %215 = sbr.rel (%p213) target = $region28
        $region27: #{tpu_custom_call.1} parent=23 // pred_region
          %s216 = sand.u32 %s18, 1
          %s217 = scalar_lea.sflag [#allocation4], %s216
          %s218 = sand.u32 %s40, 1
          %s219 = smul.addr %s218, 8
          %s220 = scalar_lea.vmem [#allocation3], %s219
          %s222 = ssub.s32 128, 128
          %223 = vsyncadd %s217, %s222
          %s224 = smul.addr %s25, 128
          %s225 = scalar_lea.hbm %s0, %s224
          %s227 = sshll.u32 %s220, 4
          %s228 = int_to_ptr.vmem [resolvable:$true] %s227
          %230 = dma.hbm_to_vmem [thread:$0]  %s225, 128, %s228, %s217
        $region28: #{tpu_custom_call.1} parent=23 // pred_fallthru
          _
        // Predicated region
        $region29: #{tpu_custom_call.1} parent=23 // pred_check
          %p231 = pneg %p118
        $region30: #{tpu_custom_call.1} parent=23 // pred_check_branch
          %233 = sbr.rel (%p231) target = $region32
        $region31: #{tpu_custom_call.1} parent=23 // pred_region
          %s234 = sand.u32 %s18, 1
          %s235 = scalar_lea.sflag [#allocation4], %s234
          %s236 = sand.u32 %s108, 1
          %s237 = smul.addr %s236, 256
          %s238 = scalar_lea.vmem [#allocation8], %s237
          %s240 = ssub.s32 4096, 4096
          %241 = vsyncadd %s235, %s240
          %s242 = smul.addr %s26, 128
          %s243 = scalar_lea.hbm %s3, %s242
          %s244 = sshll.u32 %s238, 4
          %s245 = int_to_ptr.vmem [resolvable:$true] %s244
          %250 = dma.hbm_to_vmem [thread:$0]  %s243, 4096, %s245, %s235, 256, 128, 8
        $region32: #{tpu_custom_call.1} parent=23 // pred_fallthru
          _
        // Predicated region
        $region33: #{tpu_custom_call.1} parent=23 // pred_check
          %p251 = pneg %p144
        $region34: #{tpu_custom_call.1} parent=23 // pred_check_branch
          %253 = sbr.rel (%p251) target = $region36
        $region35: #{tpu_custom_call.1} parent=23 // pred_region
          %p254 = scmp.lt.s32.totalorder %s26, 1
          %s255 = scalar_select %p254, %s26, 1
          %s256 = scalar_lea.vmem %s4, %s255
        $region36: #{tpu_custom_call.1} parent=23 // pred_fallthru
          _
      $region24: #{tpu_custom_call.1} parent=5 // pred_fallthru
        _
      %p257 = scmp.le.s32.totalorder 1, %s18
      %p258 = scmp.lt.s32.totalorder %s18, 5
      %p259 = pnand %p257, %p258
      %p260 = pneg %p259
      // Predicated region
      $region37: #{tpu_custom_call.1} parent=5 // pred_check
        _
      $region38: #{tpu_custom_call.1} parent=5 // pred_check_branch
        %262 = sbr.rel (%p259) target = $region40
      $region39: #{tpu_custom_call.1} parent=5 // pred_region
        %s263 = ssub.s32 %s18, 1
        %s264 = sand.u32 %s23, 1
        %s265 = scalar_lea.sflag [#allocation4], %s264
        %s266 = sand.u32 %s43, 1
        %s267 = smul.addr %s266, 8
        %s268 = scalar_lea.vmem [#allocation3], %s267
        // Predicated region
        $region41: #{tpu_custom_call.1} parent=39 // pred_check
          %p269 = pneg %p56
        $region42: #{tpu_custom_call.1} parent=39 // pred_check_branch
          %271 = sbr.rel (%p269) target = $region44
        $region43: #{tpu_custom_call.1} parent=39 // pred_region
          %272 = dma.done %s265, 128
        $region44: #{tpu_custom_call.1} parent=39 // pred_fallthru
          _
        // Predicated region
        $region45: #{tpu_custom_call.1} parent=39 // pred_check
          %p273 = pneg %p77
        $region46: #{tpu_custom_call.1} parent=39 // pred_check_branch
          %275 = sbr.rel (%p273) target = $region48
        $region47: #{tpu_custom_call.1} parent=39 // pred_region
          %276 = dma.done [#allocation7], 2048
        $region48: #{tpu_custom_call.1} parent=39 // pred_fallthru
          _
        %s277 = sand.u32 %s23, 1
        %s278 = scalar_lea.sflag [#allocation4], %s277
        %s279 = sand.u32 %s111, 1
        %s280 = smul.addr %s279, 256
        %s281 = scalar_lea.vmem [#allocation8], %s280
        // Predicated region
        $region49: #{tpu_custom_call.1} parent=39 // pred_check
          %p282 = pneg %p124
        $region50: #{tpu_custom_call.1} parent=39 // pred_check_branch
          %284 = sbr.rel (%p282) target = $region52
        $region51: #{tpu_custom_call.1} parent=39 // pred_region
          %285 = dma.done %s278, 4096
        $region52: #{tpu_custom_call.1} parent=39 // pred_fallthru
          _
        %s286 = sand.u32 %s23, 1
        %s287 = scalar_lea.sflag [#allocation4], %s286
        %s288 = sand.u32 %s43, 1
        %s289 = smul.addr %s288, 8
        %s290 = scalar_lea.vmem [#allocation3], %s289
        %p291 = pneg %p56
        %p292 = pneg %p53
        %p293 = pneg %p77
        %p294 = pneg %p74
        %p295 = pneg %p98
        %p296 = pneg %p95
        %s297 = sand.u32 %s23, 1
        %s298 = scalar_lea.sflag [#allocation4], %s297
        %s299 = sand.u32 %s111, 1
        %s300 = smul.addr %s299, 256
        %s301 = scalar_lea.vmem [#allocation8], %s300
        %p302 = pneg %p124
        %p303 = pneg %p121
        %p304 = scmp.lt.s32.totalorder %s28, 1
        %s305 = scalar_select %p304, %s28, 1
        %s306 = scalar_lea.vmem %s4, %s305
        %p307 = pneg %p150
        %p308 = pneg %p147
        %p309 = pneg %p178
        %p310 = pneg %p175
        %s311 = sand.u32 %s165, 1
        %s312 = scalar_lea.sflag [#allocation5], %s311
        %s313 = sand.u32 %s165, 1
        %s314 = smul.addr %s313, 8
        %s315 = scalar_lea.vmem [#allocation9], %s314
        %p316 = scmp.lt.s32.totalorder %s28, 1
        %s317 = scalar_select %p316, %s28, 1
        %s318 = scalar_lea.vmem %s4, %s317
        %p319 = scmp.eq.s32.totalorder %s28, 0
        // Predicated region
        $region53: #{tpu_custom_call.1} parent=39 // pred_check
          %p320 = pneg %p319
        $region54: #{tpu_custom_call.1} parent=39 // pred_check_branch
          %322 = sbr.rel (%p320) target = $region56
        $region55: #{tpu_custom_call.1} parent=39 // pred_region
          %v323 = vld [vmem:[%s268] sm:$0xff]
          %v324 = vld [vmem:[#allocation6] sm:$0xff]
          %v325 = vld [vmem:[#allocation6 + $0x8] sm:$0xff]
          %v326 = vld [vmem:[#allocation6 + $0x10] sm:$0xff]
          %v327 = vld [vmem:[#allocation6 + $0x18] sm:$0xff]
          %v328 = vld [vmem:[#allocation6 + $0x20] sm:$0xff]
          %v329 = vld [vmem:[#allocation6 + $0x28] sm:$0xff]
          %v330 = vld [vmem:[#allocation6 + $0x30] sm:$0xff]
          %v331 = vld [vmem:[#allocation6 + $0x38] sm:$0xff]
          %v332 = vld [vmem:[#allocation6 + $0x40] sm:$0xff]
          %v333 = vld [vmem:[#allocation6 + $0x48] sm:$0xff]
          %v334 = vld [vmem:[#allocation6 + $0x50] sm:$0xff]
          %v335 = vld [vmem:[#allocation6 + $0x58] sm:$0xff]
          %v336 = vld [vmem:[#allocation6 + $0x60] sm:$0xff]
          %v337 = vld [vmem:[#allocation6 + $0x68] sm:$0xff]
          %v338 = vld [vmem:[#allocation6 + $0x70] sm:$0xff]
          %v339 = vld [vmem:[#allocation6 + $0x78] sm:$0xff]
          %v340 = vld [vmem:[%s2] sm:$0x3]
          %v342 = vlaneseq
          %v343 = vshrl.u32 %v342, 7
          %v344 = vsub.s32 0, %v343
          %v345 = vrot.slane %v340, %v344
          %v346 = vlaneseq
          %v347 = vshrl.u32 %v346, 7
          %v348 = vsub.s32 1, %v347
          %v349 = vrot.slane %v340, %v348
          %vm352 = vcmask 523264
          %v354 = vsel %vm352, %v323, 0
          %356 = vmatprep.subr.mxu0 0.0
          %357 = vmatpush1.msra.mxu0 0.0
          %358 = vmatprep.subr.mxu0 0.0
          %359 = vmatpush1.msra.mxu0 0.0
          %360 = vmatprep.subr.mxu0 0.0
          %361 = vmatpush1.msra.mxu0 0.0
          %362 = vmatprep.subr.mxu0 0.0
          %363 = vmatpush1.msra.mxu0 0.0
          %364 = vmatprep.subr.mxu0 0.0
          %365 = vmatpush1.msra.mxu0 0.0
          %366 = vmatprep.subr.mxu0 0.0
          %367 = vmatpush1.msra.mxu0 0.0
          %368 = vmatprep.subr.mxu0 0.0
          %369 = vmatpush1.msra.mxu0 0.0
          %370 = vmatprep.subr.mxu0 0.0
          %371 = vmatpush1.msra.mxu0 0.0
          %372 = vmatprep.subr.mxu0 %v339
          %373 = vmatpush1.msra.mxu0 %v338
          %374 = vmatprep.subr.mxu0 %v337
          %375 = vmatpush1.msra.mxu0 %v336
          %376 = vmatprep.subr.mxu0 %v335
          %377 = vmatpush1.msra.mxu0 %v334
          %378 = vmatprep.subr.mxu0 %v333
          %379 = vmatpush1.msra.mxu0 %v332
          %380 = vmatprep.subr.mxu0 %v331
          %381 = vmatpush1.msra.mxu0 %v330
          %382 = vmatprep.subr.mxu0 %v329
          %383 = vmatpush1.msra.mxu0 %v328
          %384 = vmatprep.subr.mxu0 %v327
          %385 = vmatpush1.msra.mxu0 %v326
          %386 = vmatprep.subr.mxu0 %v325
          %387 = vmatpush1.msra.mxu0 %v324
          %388 = vmatprep.subr.mxu0 0.0
          %389 = vmatpush2.msra.mxu0 0.0
          %390 = vmatprep.subr.mxu0 0.0
          %391 = vmatpush2.msra.mxu0 0.0
          %392 = vmatprep.subr.mxu0 0.0
          %393 = vmatpush2.msra.mxu0 0.0
          %394 = vmatprep.subr.mxu0 0.0
          %395 = vmatpush2.msra.mxu0 0.0
          %396 = vmatprep.subr.mxu0 0.0
          %397 = vmatpush2.msra.mxu0 0.0
          %398 = vmatprep.subr.mxu0 0.0
          %399 = vmatpush2.msra.mxu0 0.0
          %400 = vmatprep.subr.mxu0 0.0
          %401 = vmatpush2.msra.mxu0 0.0
          %402 = vmatprep.subr.mxu0 0.0
          %403 = vmatpush2.msra.mxu0 0.0
          %404 = vmatprep.subr.mxu0 0.0
          %405 = vmatpush2.msra.mxu0 0.0
          %406 = vmatprep.subr.mxu0 0.0
          %407 = vmatpush2.msra.mxu0 0.0
          %408 = vmatprep.subr.mxu0 0.0
          %409 = vmatpush2.msra.mxu0 0.0
          %410 = vmatprep.subr.mxu0 0.0
          %411 = vmatpush2.msra.mxu0 0.0
          %412 = vmatprep.subr.mxu0 0.0
          %413 = vmatpush2.msra.mxu0 0.0
          %414 = vmatprep.subr.mxu0 0.0
          %415 = vmatpush2.msra.mxu0 0.0
          %416 = vmatprep.subr.mxu0 0.0
          %417 = vmatpush2.msra.mxu0 0.0
          %418 = vmatprep.subr.mxu0 0.0
          %419 = vmatpush2.msra.mxu0 0.0
          %420 = vmatprep.mubr.f32.mxu0 0.0
          %421 = vmatmul.mubr.f32.gmra.mxu0 %v354
          %v422 = vpop.f32.mrf.mxu0
          %v423 = vadd.f32 %v345, %v422
          %v424 = vpop.f32.mrf.mxu0
          %v425 = vadd.f32 %v349, %v424
          %426 = vdwg.mxu0
          %v427 = vmul.f32 %v423, 0.5
          %v428 = vmul.f32 %v425, 0.5
          %v429 = vmul.f32 %v423, 0.70710677
          %v430 = vmul.f32 %v425, 0.70710677
          %v431 = vand.u32 2147483647, %v429
          %v432 = vand.u32 2147483647, %v430
          %v433 = vmul.f32 %v431, 0.3275911
          %v434 = vmul.f32 %v432, 0.3275911
          %v435 = vadd.f32 %v433, 1.0
          %v436 = vadd.f32 %v434, 1.0
          %v437 = vrcp.pop %v435
          %v438 = vmul.f32 1.0, %v437
          %v439 = vrcp.pop %v436
          %v440 = vmul.f32 1.0, %v439
          %v441 = vmul.f32 %v438, 1.0614054
          %v442 = vmul.f32 %v440, 1.0614054
          %v443 = vadd.f32 %v441, -1.4531521
          %v444 = vadd.f32 %v442, -1.4531521
          %v445 = vmul.f32 %v438, %v443
          %v446 = vmul.f32 %v440, %v444
          %v447 = vadd.f32 %v445, 1.4214138
          %v448 = vadd.f32 %v446, 1.4214138
          %v449 = vmul.f32 %v438, %v447
          %v450 = vmul.f32 %v440, %v448
          %v451 = vadd.f32 %v449, -0.28449672
          %v452 = vadd.f32 %v450, -0.28449672
          %v453 = vmul.f32 %v438, %v451
          %v454 = vmul.f32 %v440, %v452
          %v455 = vadd.f32 %v453, 0.2548296
          %v456 = vadd.f32 %v454, 0.2548296
          %v457 = vmul.f32 %v438, %v455
          %v458 = vmul.f32 %v440, %v456
          %v459 = vmul.f32 %v431, %v431
          %v460 = vmul.f32 %v432, %v432
          %v461 = vsub.f32 0.0, %v459
          %v462 = vsub.f32 0.0, %v460
          %v463 = vmul.f32 %v461, 1.442695
          %v464 = vpow.pop %v463
          %v465 = vmul.f32 %v462, 1.442695
          %v466 = vpow.pop %v465
          %v467 = vmul.f32 %v457, %v464
          %v468 = vmul.f32 %v458, %v466
          %v469 = vsub.f32 1.0, %v467
          %v470 = vsub.f32 1.0, %v468
          %vm471 = vcmp.lt.f32.partialorder %v429, 0.0
          %vm472 = vcmp.lt.f32.partialorder %v430, 0.0
          %v473 = vsub.f32 0.0, %v469
          %v474 = vsub.f32 0.0, %v470
          %v475 = vsel %vm471, %v473, %v469
          %v476 = vsel %vm472, %v474, %v470
          %v477 = vadd.f32 %v475, 1.0
          %v478 = vadd.f32 %v476, 1.0
          %v479 = vmul.f32 %v427, %v477
          %v480 = vmul.f32 %v428, %v478
          %481 = vst [vmem:[#allocation2] sm:$0xff] %v479
          %482 = vst [vmem:[#allocation2 + $0x8] sm:$0xff] %v480
        $region56: #{tpu_custom_call.1} parent=39 // pred_fallthru
          _
        %v483 = vld [vmem:[#allocation2] sm:$0xff]
        %v484 = vld [vmem:[#allocation2 + $0x8] sm:$0xff]
        %v485 = vld [vmem:[%s281] sm:$0xff]
        %v486 = vld [vmem:[%s281 + $0x8] sm:$0xff]
        %v487 = vld [vmem:[%s281 + $0x10] sm:$0xff]
        %v488 = vld [vmem:[%s281 + $0x18] sm:$0xff]
        %v489 = vld [vmem:[%s281 + $0x20] sm:$0xff]
        %v490 = vld [vmem:[%s281 + $0x28] sm:$0xff]
        %v491 = vld [vmem:[%s281 + $0x30] sm:$0xff]
        %v492 = vld [vmem:[%s281 + $0x38] sm:$0xff]
        %v493 = vld [vmem:[%s281 + $0x40] sm:$0xff]
        %v494 = vld [vmem:[%s281 + $0x48] sm:$0xff]
        %v495 = vld [vmem:[%s281 + $0x50] sm:$0xff]
        %v496 = vld [vmem:[%s281 + $0x58] sm:$0xff]
        %v497 = vld [vmem:[%s281 + $0x60] sm:$0xff]
        %v498 = vld [vmem:[%s281 + $0x68] sm:$0xff]
        %v499 = vld [vmem:[%s281 + $0x70] sm:$0xff]
        %v500 = vld [vmem:[%s281 + $0x78] sm:$0xff]
        %v501 = vld [vmem:[%s281 + $0x80] sm:$0xff]
        %v502 = vld [vmem:[%s281 + $0x88] sm:$0xff]
        %v503 = vld [vmem:[%s281 + $0x90] sm:$0xff]
        %v504 = vld [vmem:[%s281 + $0x98] sm:$0xff]
        %v505 = vld [vmem:[%s281 + $0xa0] sm:$0xff]
        %v506 = vld [vmem:[%s281 + $0xa8] sm:$0xff]
        %v507 = vld [vmem:[%s281 + $0xb0] sm:$0xff]
        %v508 = vld [vmem:[%s281 + $0xb8] sm:$0xff]
        %v509 = vld [vmem:[%s281 + $0xc0] sm:$0xff]
        %v510 = vld [vmem:[%s281 + $0xc8] sm:$0xff]
        %v511 = vld [vmem:[%s281 + $0xd0] sm:$0xff]
        %v512 = vld [vmem:[%s281 + $0xd8] sm:$0xff]
        %v513 = vld [vmem:[%s281 + $0xe0] sm:$0xff]
        %v514 = vld [vmem:[%s281 + $0xe8] sm:$0xff]
        %v515 = vld [vmem:[%s281 + $0xf0] sm:$0xff]
        %v516 = vld [vmem:[%s281 + $0xf8] sm:$0xff]
        %v517 = vld [vmem:[%s318] sm:$0x1]
        %v519 = vlaneseq
        %v520 = vshrl.u32 %v519, 7
        %v521 = vsub.s32 0, %v520
        %v522 = vrot.slane %v517, %v521
        %524 = vmatprep.subr.mxu0 0.0
        %525 = vmatpush1.msra.mxu0 %v500
        %526 = vmatprep.subr.mxu0 0.0
        %527 = vmatpush1.msra.mxu0 %v499
        %528 = vmatprep.subr.mxu0 0.0
        %529 = vmatpush1.msra.mxu0 %v498
        %530 = vmatprep.subr.mxu0 0.0
        %531 = vmatpush1.msra.mxu0 %v497
        %532 = vmatprep.subr.mxu0 0.0
        %533 = vmatpush1.msra.mxu0 %v496
        %534 = vmatprep.subr.mxu0 0.0
        %535 = vmatpush1.msra.mxu0 %v495
        %536 = vmatprep.subr.mxu0 0.0
        %537 = vmatpush1.msra.mxu0 %v494
        %538 = vmatprep.subr.mxu0 0.0
        %539 = vmatpush1.msra.mxu0 %v493
        %540 = vmatprep.subr.mxu0 0.0
        %541 = vmatpush1.msra.mxu0 %v492
        %542 = vmatprep.subr.mxu0 0.0
        %543 = vmatpush1.msra.mxu0 %v491
        %544 = vmatprep.subr.mxu0 0.0
        %545 = vmatpush1.msra.mxu0 %v490
        %546 = vmatprep.subr.mxu0 0.0
        %547 = vmatpush1.msra.mxu0 %v489
        %548 = vmatprep.subr.mxu0 0.0
        %549 = vmatpush1.msra.mxu0 %v488
        %550 = vmatprep.subr.mxu0 0.0
        %551 = vmatpush1.msra.mxu0 %v487
        %552 = vmatprep.subr.mxu0 0.0
        %553 = vmatpush1.msra.mxu0 %v486
        %554 = vmatprep.subr.mxu0 0.0
        %555 = vmatpush1.msra.mxu0 %v485
        %556 = vmatprep.subr.mxu0 0.0
        %557 = vmatpush2.msra.mxu0 %v516
        %558 = vmatprep.subr.mxu0 0.0
        %559 = vmatpush2.msra.mxu0 %v515
        %560 = vmatprep.subr.mxu0 0.0
        %561 = vmatpush2.msra.mxu0 %v514
        %562 = vmatprep.subr.mxu0 0.0
        %563 = vmatpush2.msra.mxu0 %v513
        %564 = vmatprep.subr.mxu0 0.0
        %565 = vmatpush2.msra.mxu0 %v512
        %566 = vmatprep.subr.mxu0 0.0
        %567 = vmatpush2.msra.mxu0 %v511
        %568 = vmatprep.subr.mxu0 0.0
        %569 = vmatpush2.msra.mxu0 %v510
        %570 = vmatprep.subr.mxu0 0.0
        %571 = vmatpush2.msra.mxu0 %v509
        %572 = vmatprep.subr.mxu0 0.0
        %573 = vmatpush2.msra.mxu0 %v508
        %574 = vmatprep.subr.mxu0 0.0
        %575 = vmatpush2.msra.mxu0 %v507
        %576 = vmatprep.subr.mxu0 0.0
        %577 = vmatpush2.msra.mxu0 %v506
        %578 = vmatprep.subr.mxu0 0.0
        %579 = vmatpush2.msra.mxu0 %v505
        %580 = vmatprep.subr.mxu0 0.0
        %581 = vmatpush2.msra.mxu0 %v504
        %582 = vmatprep.subr.mxu0 0.0
        %583 = vmatpush2.msra.mxu0 %v503
        %584 = vmatprep.subr.mxu0 0.0
        %585 = vmatpush2.msra.mxu0 %v502
        %586 = vmatprep.subr.mxu0 0.0
        %587 = vmatpush2.msra.mxu0 %v501
        %588 = vmatprep.mubr.f32.mxu0 %v484
        %589 = vmatmul.mubr.f32.gmra.mxu0 %v483
        %v590 = vpop.f32.mrf.mxu0
        %v591 = vadd.f32 %v522, %v590
        %v592 = vpop.f32.mrf.mxu0
        %593 = vdwg.mxu0
        %594 = vst [vmem:[%s315] sm:$0xff] %v591
        %s595 = sand.u32 %s165, 1
        %s596 = scalar_lea.sflag [#allocation5], %s595
        %s597 = sand.u32 %s165, 1
        %s598 = smul.addr %s597, 8
        %s599 = scalar_lea.vmem [#allocation9], %s598
        // Predicated region
        $region57: #{tpu_custom_call.1} parent=39 // pred_check
          %p600 = pneg %p175
        $region58: #{tpu_custom_call.1} parent=39 // pred_check_branch
          %602 = sbr.rel (%p600) target = $region60
        $region59: #{tpu_custom_call.1} parent=39 // pred_region
          %s604 = ssub.s32 128, 128
          %605 = vsyncadd %s596, %s604
          %s606 = smul.addr %s27, 2
          %s607 = sadd.s32 %s28, %s606
          %s608 = smul.addr %s607, 128
          %s609 = scalar_lea.hbm %s5, %s608
          %s611 = sshll.u32 %s599, 4
          %s612 = int_to_ptr.vmem [resolvable:$true] %s611
          %614 = dma.vmem_to_hbm [thread:$0]  %s612, 128, %s609, %s596
        $region60: #{tpu_custom_call.1} parent=39 // pred_fallthru
          _
      $region40: #{tpu_custom_call.1} parent=5 // pred_fallthru
        _
      %p615 = scmp.le.s32.totalorder 2, %s18
      // Predicated region
      $region61: #{tpu_custom_call.1} parent=5 // pred_check
        %p616 = pneg %p615
      $region62: #{tpu_custom_call.1} parent=5 // pred_check_branch
        %618 = sbr.rel (%p616) target = $region64
      $region63: #{tpu_custom_call.1} parent=5 // pred_region
        %s619 = ssub.s32 %s18, 2
        // Predicated region
        $region65: #{tpu_custom_call.1} parent=63 // pred_check
          %p620 = pneg %p181
        $region66: #{tpu_custom_call.1} parent=63 // pred_check_branch
          %622 = sbr.rel (%p620) target = $region68
        $region67: #{tpu_custom_call.1} parent=63 // pred_region
          %s623 = sand.u32 %s166, 1
          %s624 = scalar_lea.sflag [#allocation5], %s623
          %s625 = sand.u32 %s166, 1
          %s626 = smul.addr %s625, 8
          %s627 = scalar_lea.vmem [#allocation9], %s626
          %628 = dma.done %s624, 128
        $region68: #{tpu_custom_call.1} parent=63 // pred_fallthru
          _
      $region64: #{tpu_custom_call.1} parent=5 // pred_fallthru
        _
    $region6: #{tpu_custom_call.1} parent=1 // loop_footer
      %s22 = sadd.s32 1, %s18
    $region7: #{tpu_custom_call.1} parent=1 // loop_footer_branch
      %17 = sbr.rel target = $region3
    $region8: #{tpu_custom_call.1} parent=1 // loop_exit
      _
    %629 = vsyncpa [#allocation4], 1
    %s630 = scalar_lea.sflag [#allocation4], 1
    %631 = vsyncpa %s630, 1
    %632 = vsyncpa [#allocation7], 1
    %633 = vsyncpa [#allocation5], 1
    %s634 = scalar_lea.sflag [#allocation5], 1
    %635 = vsyncpa %s634, 1

</llo_original>
